<compile_context>
chip_gen: v6e
topology: v6e:2x2x1
jax: 0.10.0
libtpu: 0.0.40
codegen_flags: <defaults>
</compile_context>

<pallas_src>
import jax
import jax.numpy as jnp
from jax.experimental import pallas as pl
from jax.experimental.pallas import tpu as pltpu


def simclr_kernel(patches_ref, ws_ref, bs_ref, g_ref, be_ref,
                  w1_ref, b1_ref, w2_ref, b2_ref, h_ref, z_ref):
    """One (batch-tile, token-tile) grid step of the fused encoder + projector."""
    bt, tile_t, p = patches_ref.shape
    d = h_ref.shape[-1]
    kt = pl.program_id(1)

    @pl.when(kt == 0)
    def _init():
        h_ref[...] = jnp.zeros_like(h_ref)

    # --- patchify conv as one MXU matmul over all BT*tile_t rows (bf16 in, f32 acc)
    x2d = patches_ref[...].reshape(bt * tile_t, p)
    tokens = jnp.dot(x2d, ws_ref[...],
                     preferred_element_type=jnp.float32) + bs_ref[...]   # [BT*tile_t, D]

    # --- LayerNorm over features (eps=1e-6).  mean and mean-of-squares are
    # independent lane reductions (can dual-issue on the XLUs); rsqrt -> EUP.
    mu = jnp.mean(tokens, axis=-1, keepdims=True)
    msq = jnp.mean(tokens * tokens, axis=-1, keepdims=True)
    inv = jax.lax.rsqrt(msq - mu * mu + 1e-6)
    # g_ref / be_ref are pre-scaled by 1/T in the wrapper, so summing the
    # per-token LN outputs below directly yields the global average pool.
    tok_ln = (tokens - mu) * inv * g_ref[...] + be_ref[...]

    # --- global average pool: segment-sum back to [BT, D] and accumulate into
    # the resident (sublane-dense) output block.  No scratch accumulator.
    h_ref[...] += jnp.sum(tok_ln.reshape(bt, tile_t, d), axis=1)

    # --- projector fused into the finalize step: Linear -> ReLU -> Linear on
    # the resident [BT, D] pooled features (no second launch / HBM round trip).
    @pl.when(kt == pl.num_programs(1) - 1)
    def _finalize():
        hb = h_ref[...].astype(jnp.bfloat16)
        a = jnp.dot(hb, w1_ref[...], preferred_element_type=jnp.float32) + b1_ref[...]
        a = jnp.maximum(a, 0.0)                                          # [BT, H]
        z_ref[...] = jnp.dot(a.astype(jnp.bfloat16), w2_ref[...],
                             preferred_element_type=jnp.float32) + b2_ref[...]  # [BT, Z]


def _pick_token_tile(t, bt, p, d, budget_bytes=24 << 20):
    """Largest token tile whose streamed patch slab (2x buffered, bf16) plus
    f32 activation intermediates fit a conservative VMEM budget.  Prefers the
    whole token axis in one step; otherwise a large divisor of T."""
    def cost(tile):
        rows = bt * tile
        return rows * p * 2 * 2 + rows * d * 4 * 3

    if cost(t) <= budget_bytes:
        return t
    for cand in (2048, 1024, 512, 256, 128, 64, 32, 16):
        if t % cand == 0 and cost(cand) <= budget_bytes:
            return cand
    return t


def simclr_forward(x, params, *, patch=4, batch_tile=8):
    """x: NCHW float32 [B, C, H, W].  Returns (h [B, D], z [B, Z])."""
    B, C, H, W = x.shape
    Hp, Wp = H // patch, W // patch
    T = Hp * Wp
    P = C * patch * patch

    ws, bs, g, be, w1, b1, w2, b2 = params
    D = ws.shape[1]
    Hd = w1.shape[1]
    Z = w2.shape[1]

    # im2col of the 4x4/stride-4 patchify stem (glue, plain JAX), bf16 stream.
    patches = (x.reshape(B, C, Hp, patch, Wp, patch)
                .transpose(0, 2, 4, 1, 3, 5)
                .reshape(B, T, P)
                .astype(jnp.bfloat16))

    # Pad batch up to a multiple of the batch tile so pooled/projected outputs
    # are sublane-dense [BT, *] blocks; padded rows are sliced off afterwards.
    BT = batch_tile
    B_pad = ((B + BT - 1) // BT) * BT
    if B_pad != B:
        patches = jnp.pad(patches, ((0, B_pad - B), (0, 0), (0, 0)))

    tile_t = _pick_token_tile(T, BT, P, D)
    kt_steps = T // tile_t if T % tile_t == 0 else 1

    # Pre-scale LN affine params by 1/T so the kernel's running sum of LN
    # outputs is exactly the global average pool (numerically identical).
    inv_t = 1.0 / float(T)
    g_s = g * inv_t
    be_s = be * inv_t

    ws_bf = ws.astype(jnp.bfloat16)
    w1_bf = w1.astype(jnp.bfloat16)
    w2_bf = w2.astype(jnp.bfloat16)

    h_pad, z_pad = pl.pallas_call(
        simclr_kernel,
        out_shape=(jax.ShapeDtypeStruct((B_pad, D), jnp.float32),
                   jax.ShapeDtypeStruct((B_pad, Z), jnp.float32)),
        grid_spec=pltpu.PrefetchScalarGridSpec(
            num_scalar_prefetch=0,
            grid=(B_pad // BT, kt_steps),            # reduction (token) axis last
            in_specs=[
                pl.BlockSpec((BT, tile_t, P), lambda bt, kt: (bt, kt, 0)),
                # stem / LN / projector params: constant index maps -> VMEM resident
                pl.BlockSpec((P, D), lambda bt, kt: (0, 0)),
                pl.BlockSpec((1, D), lambda bt, kt: (0, 0)),
                pl.BlockSpec((1, D), lambda bt, kt: (0, 0)),
                pl.BlockSpec((1, D), lambda bt, kt: (0, 0)),
                pl.BlockSpec((D, Hd), lambda bt, kt: (0, 0)),
                pl.BlockSpec((1, Hd), lambda bt, kt: (0, 0)),
                pl.BlockSpec((Hd, Z), lambda bt, kt: (0, 0)),
                pl.BlockSpec((1, Z), lambda bt, kt: (0, 0)),
            ],
            out_specs=[
                pl.BlockSpec((BT, D), lambda bt, kt: (bt, 0)),
                pl.BlockSpec((BT, Z), lambda bt, kt: (bt, 0)),
            ],
        ),
        compiler_params=pltpu.CompilerParams(
            # TODO(synk): switch the batch-tile axis to pltpu.CORE_PARALLEL on
            # v7x (2 TensorCores) once there are >= 2 batch tiles.
            dimension_semantics=("parallel", "arbitrary"),
            # Headroom below v7x's 64 MiB physical VMEM; safe on v5e/v6e too.
            vmem_limit_bytes=48 << 20,
        ),
    )(patches, ws_bf, bs, g_s, be_s, w1_bf, b1, w2_bf, b2)

    return h_pad[:B], z_pad[:B]


def simclr_reference(x, params, *, patch=4):
    """Pure-JAX f32 reference of the same forward (for parity checking)."""
    B, C, H, W = x.shape
    Hp, Wp = H // patch, W // patch
    ws, bs, g, be, w1, b1, w2, b2 = params
    patches = (x.reshape(B, C, Hp, patch, Wp, patch)
                .transpose(0, 2, 4, 1, 3, 5)
                .reshape(B, Hp * Wp, -1))
    tok = patches @ ws + bs
    mu = tok.mean(-1, keepdims=True)
    var = ((tok - mu) ** 2).mean(-1, keepdims=True)
    tok = (tok - mu) / jnp.sqrt(var + 1e-6) * g + be
    h = tok.mean(1)
    a = jnp.maximum(h @ w1 + b1, 0.0)
    z = a @ w2 + b2
    return h, z


def init_params(key, *, in_ch=3, patch=4, feature_dim=256,
                hidden_dim=512, projection_dim=128):
    ks = jax.random.split(key, 8)
    P = in_ch * patch * patch
    ws = jax.random.normal(ks[0], (P, feature_dim), jnp.float32) * (1.0 / P ** 0.5)
    bs = jax.random.normal(ks[1], (1, feature_dim), jnp.float32) * 0.01
    g = jnp.ones((1, feature_dim), jnp.float32)
    be = jnp.zeros((1, feature_dim), jnp.float32)
    w1 = jax.random.normal(ks[2], (feature_dim, hidden_dim), jnp.float32) * (1.0 / feature_dim ** 0.5)
    b1 = jax.random.normal(ks[3], (1, hidden_dim), jnp.float32) * 0.01
    w2 = jax.random.normal(ks[4], (hidden_dim, projection_dim), jnp.float32) * (1.0 / hidden_dim ** 0.5)
    b2 = jax.random.normal(ks[5], (1, projection_dim), jnp.float32) * 0.01
    return (ws, bs, g, be, w1, b1, w2, b2)


if __name__ == "__main__":
    key = jax.random.PRNGKey(0)
    k_x, k_p = jax.random.split(key)

    B, C, HW = 2, 3, 16
    x = jax.random.normal(k_x, (B, C, HW, HW), jnp.float32)   # NCHW like PyTorch
    params = init_params(k_p)

    h, z = jax.jit(lambda x: simclr_forward(x, params))(x)
    jax.block_until_ready((h, z))

    assert h.shape == (B, 256) and z.shape == (B, 128)
    assert jnp.all(jnp.isfinite(h)) and jnp.all(jnp.isfinite(z))

    # Loose parity vs f32 reference (kernel streams bf16 operands with f32 acc).
    h_ref, z_ref = simclr_reference(x, params)
    assert jnp.allclose(h, h_ref, rtol=1e-1, atol=1e-1)
    assert jnp.allclose(z, z_ref, rtol=1e-1, atol=1e-1)

    print("KERNEL_OK")
</pallas_src>

<mosaic_0001>
module attributes {stable_mosaic.version = 11 : i64} {
  func.func @simclr_kernel(%arg0: i32, %arg1: i32, %arg2: memref<8x16x48xbf16, #tpu.memory_space<vmem>>, %arg3: memref<48x256xbf16, #tpu.memory_space<vmem>>, %arg4: memref<1x256xf32, #tpu.memory_space<vmem>>, %arg5: memref<1x256xf32, #tpu.memory_space<vmem>>, %arg6: memref<1x256xf32, #tpu.memory_space<vmem>>, %arg7: memref<256x512xbf16, #tpu.memory_space<vmem>>, %arg8: memref<1x512xf32, #tpu.memory_space<vmem>>, %arg9: memref<512x128xbf16, #tpu.memory_space<vmem>>, %arg10: memref<1x128xf32, #tpu.memory_space<vmem>>, %arg11: memref<8x256xf32, #tpu.memory_space<vmem>>, %arg12: memref<8x128xf32, #tpu.memory_space<vmem>>) attributes {dimension_semantics = [#tpu.dimension_semantics<parallel>, #tpu.dimension_semantics<arbitrary>], iteration_bounds = array<i64: 1, 1>, scalar_prefetch = 0 : i64, scratch_operands = 0 : i64, tpu.core_type = #tpu.core_type<tc>, window_params = [{transform_indices = @transform_0, window_bounds = array<i64: 8, 16, 48>}, {pipeline_mode = #tpu.pipeline_mode<synchronous>, transform_indices = @transform_1, window_bounds = array<i64: 48, 256>}, {pipeline_mode = #tpu.pipeline_mode<synchronous>, transform_indices = @transform_2, window_bounds = array<i64: 1, 256>}, {pipeline_mode = #tpu.pipeline_mode<synchronous>, transform_indices = @transform_3, window_bounds = array<i64: 1, 256>}, {pipeline_mode = #tpu.pipeline_mode<synchronous>, transform_indices = @transform_4, window_bounds = array<i64: 1, 256>}, {pipeline_mode = #tpu.pipeline_mode<synchronous>, transform_indices = @transform_5, window_bounds = array<i64: 256, 512>}, {pipeline_mode = #tpu.pipeline_mode<synchronous>, transform_indices = @transform_6, window_bounds = array<i64: 1, 512>}, {pipeline_mode = #tpu.pipeline_mode<synchronous>, transform_indices = @transform_7, window_bounds = array<i64: 512, 128>}, {pipeline_mode = #tpu.pipeline_mode<synchronous>, transform_indices = @transform_8, window_bounds = array<i64: 1, 128>}, {transform_indices = @transform_9, window_bounds = array<i64: 8, 256>}, {transform_indices = @transform_10, window_bounds = array<i64: 8, 128>}]} {
    %c0_i32 = arith.constant 0 : i32
    %0 = arith.cmpi eq, %arg1, %c0_i32 : i32
    %1 = arith.extui %0 : i1 to i32
    %c0_i32_0 = arith.constant 0 : i32
    %2 = arith.cmpi ne, %1, %c0_i32_0 : i32
    scf.if %2 {
      %cst_23 = arith.constant 0.000000e+00 : f32
      %42 = vector.broadcast %cst_23 : f32 to vector<8x256xf32>
      %c0_24 = arith.constant 0 : index
      %c0_25 = arith.constant 0 : index
      %43 = vector.load %arg11[%c0_24, %c0_25] : memref<8x256xf32, #tpu.memory_space<vmem>>, vector<8x256xf32>
      tpu.vector_store %arg11[%c0_24, %c0_25], %42 {strides = array<i32>} : memref<8x256xf32, #tpu.memory_space<vmem>>, vector<8x256xf32>,
    } else {
    }
    %c0 = arith.constant 0 : index
    %c0_1 = arith.constant 0 : index
    %c0_2 = arith.constant 0 : index
    %3 = vector.load %arg2[%c0, %c0_1, %c0_2] : memref<8x16x48xbf16, #tpu.memory_space<vmem>>, vector<8x16x48xbf16>
    %4 = vector.shape_cast %3 : vector<8x16x48xbf16> to vector<128x48xbf16>
    %c0_3 = arith.constant 0 : index
    %c0_4 = arith.constant 0 : index
    %5 = vector.load %arg3[%c0_3, %c0_4] : memref<48x256xbf16, #tpu.memory_space<vmem>>, vector<48x256xbf16>
    %cst = arith.constant dense<0.000000e+00> : vector<128x256xf32>
    %6 = tpu.matmul %4, %5, %cst {dimension_numbers = #tpu.dot_dimension_numbers<[1], [0], [0], [1], [0, 0, 1, 1], [], []>} : vector<128x48xbf16>, vector<48x256xbf16>, vector<128x256xf32> -> vector<128x256xf32>
    %c0_5 = arith.constant 0 : index
    %c0_6 = arith.constant 0 : index
    %7 = vector.load %arg4[%c0_5, %c0_6] : memref<1x256xf32, #tpu.memory_space<vmem>>, vector<1x256xf32>
    %8 = vector.broadcast %7 : vector<1x256xf32> to vector<128x256xf32>
    %9 = arith.addf %6, %8 : vector<128x256xf32>
    %cst_7 = arith.constant dense<0.000000e+00> : vector<128xf32>
    %10 = vector.multi_reduction <add>, %9, %cst_7 [1] : vector<128x256xf32> to vector<128xf32>
    %11 = vector.shape_cast %10 : vector<128xf32> to vector<128x1xf32>
    %cst_8 = arith.constant 2.560000e+02 : f32
    %12 = vector.broadcast %cst_8 : f32 to vector<128x1xf32>
    %13 = arith.divf %11, %12 : vector<128x1xf32>
    %14 = arith.mulf %9, %9 : vector<128x256xf32>
    %cst_9 = arith.constant dense<0.000000e+00> : vector<128xf32>
    %15 = vector.multi_reduction <add>, %14, %cst_9 [1] : vector<128x256xf32> to vector<128xf32>
    %16 = vector.shape_cast %15 : vector<128xf32> to vector<128x1xf32>
    %cst_10 = arith.constant 2.560000e+02 : f32
    %17 = vector.broadcast %cst_10 : f32 to vector<128x1xf32>
    %18 = arith.divf %16, %17 : vector<128x1xf32>
    %19 = arith.mulf %13, %13 : vector<128x1xf32>
    %20 = arith.subf %18, %19 : vector<128x1xf32>
    %cst_11 = arith.constant 9.99999997E-7 : f32
    %21 = vector.broadcast %cst_11 : f32 to vector<128x1xf32>
    %22 = arith.addf %20, %21 : vector<128x1xf32>
    %23 = math.rsqrt %22 : vector<128x1xf32>
    %24 = vector.broadcast %13 : vector<128x1xf32> to vector<128x256xf32>
    %25 = arith.subf %9, %24 : vector<128x256xf32>
    %26 = vector.broadcast %23 : vector<128x1xf32> to vector<128x256xf32>
    %27 = arith.mulf %25, %26 : vector<128x256xf32>
    %c0_12 = arith.constant 0 : index
    %c0_13 = arith.constant 0 : index
    %28 = vector.load %arg5[%c0_12, %c0_13] : memref<1x256xf32, #tpu.memory_space<vmem>>, vector<1x256xf32>
    %29 = vector.broadcast %28 : vector<1x256xf32> to vector<128x256xf32>
    %30 = arith.mulf %27, %29 : vector<128x256xf32>
    %c0_14 = arith.constant 0 : index
    %c0_15 = arith.constant 0 : index
    %31 = vector.load %arg6[%c0_14, %c0_15] : memref<1x256xf32, #tpu.memory_space<vmem>>, vector<1x256xf32>
    %32 = vector.broadcast %31 : vector<1x256xf32> to vector<128x256xf32>
    %33 = arith.addf %30, %32 : vector<128x256xf32>
    %c0_16 = arith.constant 0 : index
    %c0_17 = arith.constant 0 : index
    %34 = vector.load %arg11[%c0_16, %c0_17] : memref<8x256xf32, #tpu.memory_space<vmem>>, vector<8x256xf32>
    %35 = vector.shape_cast %33 : vector<128x256xf32> to vector<8x16x256xf32>
    %cst_18 = arith.constant dense<0.000000e+00> : vector<8x256xf32>
    %36 = vector.multi_reduction <add>, %35, %cst_18 [1] : vector<8x16x256xf32> to vector<8x256xf32>
    %37 = arith.addf %34, %36 : vector<8x256xf32>
    %c0_19 = arith.constant 0 : index
    %c0_20 = arith.constant 0 : index
    %38 = vector.load %arg11[%c0_19, %c0_20] : memref<8x256xf32, #tpu.memory_space<vmem>>, vector<8x256xf32>
    tpu.vector_store %arg11[%c0_19, %c0_20], %37 {strides = array<i32>} : memref<8x256xf32, #tpu.memory_space<vmem>>, vector<8x256xf32>,
    %c0_i32_21 = arith.constant 0 : i32
    %39 = arith.cmpi eq, %arg1, %c0_i32_21 : i32
    %40 = arith.extui %39 : i1 to i32
    %c0_i32_22 = arith.constant 0 : i32
    %41 = arith.cmpi ne, %40, %c0_i32_22 : i32
    scf.if %41 {
      %c0_23 = arith.constant 0 : index
      %c0_24 = arith.constant 0 : index
      %42 = vector.load %arg11[%c0_23, %c0_24] : memref<8x256xf32, #tpu.memory_space<vmem>>, vector<8x256xf32>
      %43 = arith.truncf %42 : vector<8x256xf32> to vector<8x256xbf16>
      %c0_25 = arith.constant 0 : index
      %c0_26 = arith.constant 0 : index
      %44 = vector.load %arg7[%c0_25, %c0_26] : memref<256x512xbf16, #tpu.memory_space<vmem>>, vector<256x512xbf16>
      %cst_27 = arith.constant dense<0.000000e+00> : vector<8x512xf32>
      %45 = tpu.matmul %43, %44, %cst_27 {dimension_numbers = #tpu.dot_dimension_numbers<[1], [0], [0], [1], [0, 0, 1, 1], [], []>} : vector<8x256xbf16>, vector<256x512xbf16>, vector<8x512xf32> -> vector<8x512xf32>
      %c0_28 = arith.constant 0 : index
      %c0_29 = arith.constant 0 : index
      %46 = vector.load %arg8[%c0_28, %c0_29] : memref<1x512xf32, #tpu.memory_space<vmem>>, vector<1x512xf32>
      %47 = vector.broadcast %46 : vector<1x512xf32> to vector<8x512xf32>
      %48 = arith.addf %45, %47 : vector<8x512xf32>
      %cst_30 = arith.constant 0.000000e+00 : f32
      %49 = vector.broadcast %cst_30 : f32 to vector<8x512xf32>
      %50 = arith.maximumf %48, %49 : vector<8x512xf32>
      %51 = arith.truncf %50 : vector<8x512xf32> to vector<8x512xbf16>
      %c0_31 = arith.constant 0 : index
      %c0_32 = arith.constant 0 : index
      %52 = vector.load %arg9[%c0_31, %c0_32] : memref<512x128xbf16, #tpu.memory_space<vmem>>, vector<512x128xbf16>
      %cst_33 = arith.constant dense<0.000000e+00> : vector<8x128xf32>
      %53 = tpu.matmul %51, %52, %cst_33 {dimension_numbers = #tpu.dot_dimension_numbers<[1], [0], [0], [1], [0, 0, 1, 1], [], []>} : vector<8x512xbf16>, vector<512x128xbf16>, vector<8x128xf32> -> vector<8x128xf32>
      %c0_34 = arith.constant 0 : index
      %c0_35 = arith.constant 0 : index
      %54 = vector.load %arg10[%c0_34, %c0_35] : memref<1x128xf32, #tpu.memory_space<vmem>>, vector<1x128xf32>
      %55 = vector.broadcast %54 : vector<1x128xf32> to vector<8x128xf32>
      %56 = arith.addf %53, %55 : vector<8x128xf32>
      %c0_36 = arith.constant 0 : index
      %c0_37 = arith.constant 0 : index
      %57 = vector.load %arg12[%c0_36, %c0_37] : memref<8x128xf32, #tpu.memory_space<vmem>>, vector<8x128xf32>
      tpu.vector_store %arg12[%c0_36, %c0_37], %56 {strides = array<i32>} : memref<8x128xf32, #tpu.memory_space<vmem>>, vector<8x128xf32>,
    } else {
    }
    return
  }
  func.func @transform_0(%arg0: i32, %arg1: i32) -> (i32, i32, i32) {
    %c0_i32 = arith.constant 0 : i32
    %c0_i32_0 = arith.constant 0 : i32
    return %arg0, %arg1, %c0_i32 : i32, i32, i32
  }
  func.func @transform_1(%arg0: i32, %arg1: i32) -> (i32, i32) {
    %c0_i32 = arith.constant 0 : i32
    %c0_i32_0 = arith.constant 0 : i32
    %c0_i32_1 = arith.constant 0 : i32
    return %c0_i32, %c0_i32_0 : i32, i32
  }
  func.func @transform_2(%arg0: i32, %arg1: i32) -> (i32, i32) {
    %c0_i32 = arith.constant 0 : i32
    %c0_i32_0 = arith.constant 0 : i32
    %c0_i32_1 = arith.constant 0 : i32
    return %c0_i32, %c0_i32_0 : i32, i32
  }
  func.func @transform_3(%arg0: i32, %arg1: i32) -> (i32, i32) {
    %c0_i32 = arith.constant 0 : i32
    %c0_i32_0 = arith.constant 0 : i32
    %c0_i32_1 = arith.constant 0 : i32
    return %c0_i32, %c0_i32_0 : i32, i32
  }
  func.func @transform_4(%arg0: i32, %arg1: i32) -> (i32, i32) {
    %c0_i32 = arith.constant 0 : i32
    %c0_i32_0 = arith.constant 0 : i32
    %c0_i32_1 = arith.constant 0 : i32
    return %c0_i32, %c0_i32_0 : i32, i32
  }
  func.func @transform_5(%arg0: i32, %arg1: i32) -> (i32, i32) {
    %c0_i32 = arith.constant 0 : i32
    %c0_i32_0 = arith.constant 0 : i32
    %c0_i32_1 = arith.constant 0 : i32
    return %c0_i32, %c0_i32_0 : i32, i32
  }
  func.func @transform_6(%arg0: i32, %arg1: i32) -> (i32, i32) {
    %c0_i32 = arith.constant 0 : i32
    %c0_i32_0 = arith.constant 0 : i32
    %c0_i32_1 = arith.constant 0 : i32
    return %c0_i32, %c0_i32_0 : i32, i32
  }
  func.func @transform_7(%arg0: i32, %arg1: i32) -> (i32, i32) {
    %c0_i32 = arith.constant 0 : i32
    %c0_i32_0 = arith.constant 0 : i32
    %c0_i32_1 = arith.constant 0 : i32
    return %c0_i32, %c0_i32_0 : i32, i32
  }
  func.func @transform_8(%arg0: i32, %arg1: i32) -> (i32, i32) {
    %c0_i32 = arith.constant 0 : i32
    %c0_i32_0 = arith.constant 0 : i32
    %c0_i32_1 = arith.constant 0 : i32
    return %c0_i32, %c0_i32_0 : i32, i32
  }
  func.func @transform_9(%arg0: i32, %arg1: i32) -> (i32, i32) {
    %c0_i32 = arith.constant 0 : i32
    %c0_i32_0 = arith.constant 0 : i32
    return %arg0, %c0_i32 : i32, i32
  }
  func.func @transform_10(%arg0: i32, %arg1: i32) -> (i32, i32) {
    %c0_i32 = arith.constant 0 : i32
    %c0_i32_0 = arith.constant 0 : i32
    return %arg0, %c0_i32 : i32, i32
  }
}

</mosaic_0001>

<llo_original>
// kernel: mul.2
$region0: #{mul.2}
  #allocation0 [shape = 's32[1]{0}', space=sflag, size = 0x4, scoped, tag = 'scoped memory for mul.2']
  %s0 = inlined_call_operand.<no memory space> [shape: f32[], index: 0, kind: input, shape index: {}]
  %s1 = inlined_call_operand.vmem [shape: f32[1,256], index: 1, kind: output, shape index: {}]
  %v2 = vstv %s0
  %3 = vst [vmem:[%s1] sm:$0x1] %v2
  %s4 = scalar_lea.vmem %s1, 1
  %5 = vst [vmem:[%s4] sm:$0x1] %v2

// kernel: _lambda_.1
$region0: #{_lambda_.1}
  #allocation0 [shape = 'u32[]', space=smem, size = 0x4, offset = 0x4, fixed_abs, tag = 'smem constant byte address 0x4 - core index']
  #allocation1 [shape = 'u32[144,128]{1,0:T(1,128)}', space=vmem, size = 0x12000, scoped, tag = 'internal scratch']
  %s0 = inlined_call_operand.vmem [shape: bf16[8,16,48], index: 0, kind: input, shape index: {}]
  %s1 = inlined_call_operand.vmem [shape: bf16[48,256], index: 1, kind: input, shape index: {}]
  %s2 = inlined_call_operand.vmem [shape: f32[1,256], index: 2, kind: input, shape index: {}]
  %s3 = inlined_call_operand.vmem [shape: f32[1,256], index: 3, kind: input, shape index: {}]
  %s4 = inlined_call_operand.vmem [shape: f32[1,256], index: 4, kind: input, shape index: {}]
  %s5 = inlined_call_operand.vmem [shape: bf16[256,512], index: 5, kind: input, shape index: {}]
  %s6 = inlined_call_operand.vmem [shape: f32[1,512], index: 6, kind: input, shape index: {}]
  %s7 = inlined_call_operand.vmem [shape: bf16[512,128], index: 7, kind: input, shape index: {}]
  %s8 = inlined_call_operand.vmem [shape: f32[1,128], index: 8, kind: input, shape index: {}]
  %s9 = inlined_call_operand.vmem [shape: f32[8,256], index: 9, kind: output, shape index: {0}]
  %s10 = inlined_call_operand.vmem [shape: f32[8,128], index: 10, kind: output, shape index: {1}]
  %11 = xla_tuple %s9, %s10
  %s12 = sld [smem:[#allocation0]]
  $region62: #{_lambda_.1} parent=0
    _
  %s14 = ssub.s32 1, %s12
  %s15 = scalar_select 0, %s14, %s12
  // Predicated region
  $region2: #{_lambda_.1} parent=0 // pred_check
    _
  $region3: #{_lambda_.1} parent=0 // pred_check_branch
    %17 = sbr.rel (0) target = $region5
  $region4: #{_lambda_.1} parent=0 // pred_region
    _
  $region5: #{_lambda_.1} parent=0 // pred_fallthru
    _
  // Predicated region
  $region6: #{_lambda_.1} parent=0 // pred_check
    _
  $region7: #{_lambda_.1} parent=0 // pred_check_branch
    %19 = sbr.rel (0) target = $region9
  $region8: #{_lambda_.1} parent=0 // pred_region
    _
  $region9: #{_lambda_.1} parent=0 // pred_fallthru
    _
  // Predicated region
  $region10: #{_lambda_.1} parent=0 // pred_check
    _
  $region11: #{_lambda_.1} parent=0 // pred_check_branch
    %21 = sbr.rel (0) target = $region13
  $region12: #{_lambda_.1} parent=0 // pred_region
    _
  $region13: #{_lambda_.1} parent=0 // pred_fallthru
    _
  // Predicated region
  $region14: #{_lambda_.1} parent=0 // pred_check
    _
  $region15: #{_lambda_.1} parent=0 // pred_check_branch
    %23 = sbr.rel (0) target = $region17
  $region16: #{_lambda_.1} parent=0 // pred_region
    _
  $region17: #{_lambda_.1} parent=0 // pred_fallthru
    _
  // Predicated region
  $region18: #{_lambda_.1} parent=0 // pred_check
    _
  $region19: #{_lambda_.1} parent=0 // pred_check_branch
    %25 = sbr.rel (0) target = $region21
  $region20: #{_lambda_.1} parent=0 // pred_region
    _
  $region21: #{_lambda_.1} parent=0 // pred_fallthru
    _
  // Predicated region
  $region22: #{_lambda_.1} parent=0 // pred_check
    _
  $region23: #{_lambda_.1} parent=0 // pred_check_branch
    %27 = sbr.rel (0) target = $region25
  $region24: #{_lambda_.1} parent=0 // pred_region
    _
  $region25: #{_lambda_.1} parent=0 // pred_fallthru
    _
  // Predicated region
  $region26: #{_lambda_.1} parent=0 // pred_check
    _
  $region27: #{_lambda_.1} parent=0 // pred_check_branch
    %29 = sbr.rel (0) target = $region29
  $region28: #{_lambda_.1} parent=0 // pred_region
    _
  $region29: #{_lambda_.1} parent=0 // pred_fallthru
    _
  // Predicated region
  $region30: #{_lambda_.1} parent=0 // pred_check
    _
  $region31: #{_lambda_.1} parent=0 // pred_check_branch
    %31 = sbr.rel (0) target = $region33
  $region32: #{_lambda_.1} parent=0 // pred_region
    _
  $region33: #{_lambda_.1} parent=0 // pred_fallthru
    _
  // Predicated region
  $region34: #{_lambda_.1} parent=0 // pred_check
    _
  $region35: #{_lambda_.1} parent=0 // pred_check_branch
    %33 = sbr.rel (0) target = $region37
  $region36: #{_lambda_.1} parent=0 // pred_region
    _
  $region37: #{_lambda_.1} parent=0 // pred_fallthru
    _
  %p35 = scmp.eq.s32.totalorder 0, 0
  // Predicated region
  $region38: #{_lambda_.1} parent=0 // pred_check
    %p36 = pneg %p35
  $region39: #{_lambda_.1} parent=0 // pred_check_branch
    %38 = sbr.rel (%p36) target = $region41
  $region40: #{_lambda_.1} parent=0 // pred_region
    %39 = vst [vmem:[%s9] sm:$0xff] 0.0
    %40 = vst [vmem:[%s9 + $0x8] sm:$0xff] 0.0
  $region41: #{_lambda_.1} parent=0 // pred_fallthru
    _
  %v41 = vld [vmem:[%s0] sm:$0xf]
  %v42 = vld [vmem:[%s0 + $0x4] sm:$0xf]
  %v43 = vld [vmem:[%s0 + $0x8] sm:$0xf]
  %v44 = vld [vmem:[%s0 + $0xc] sm:$0xf]
  %v45 = vld [vmem:[%s0 + $0x10] sm:$0xf]
  %v46 = vld [vmem:[%s0 + $0x14] sm:$0xf]
  %v47 = vld [vmem:[%s0 + $0x18] sm:$0xf]
  %v48 = vld [vmem:[%s0 + $0x1c] sm:$0xf]
  %v49 = vld [vmem:[%s0 + $0x20] sm:$0xf]
  %v50 = vld [vmem:[%s0 + $0x24] sm:$0xf]
  %v51 = vld [vmem:[%s0 + $0x28] sm:$0xf]
  %v52 = vld [vmem:[%s0 + $0x2c] sm:$0xf]
  %v53 = vld [vmem:[%s0 + $0x30] sm:$0xf]
  %v54 = vld [vmem:[%s0 + $0x34] sm:$0xf]
  %v55 = vld [vmem:[%s0 + $0x38] sm:$0xf]
  %v56 = vld [vmem:[%s0 + $0x3c] sm:$0xf]
  %v57 = vld [vmem:[%s1] sm:$0xff]
  %v58 = vld [vmem:[%s1 + $0x8] sm:$0xff]
  %v59 = vld [vmem:[%s1 + $0x10] sm:$0xff]
  %v60 = vld [vmem:[%s1 + $0x18] sm:$0xff]
  %v61 = vld [vmem:[%s1 + $0x20] sm:$0xff]
  %v62 = vld [vmem:[%s1 + $0x28] sm:$0xff]
  %v63 = vld [vmem:[%s2] sm:$0x3]
  %v65 = vlaneseq
  %v66 = vshrl.u32 %v65, 7
  %v67 = vsub.s32 0, %v66
  %v68 = vrot.slane %v63, %v67
  %v69 = vlaneseq
  %v70 = vshrl.u32 %v69, 7
  %v71 = vsub.s32 1, %v70
  %v72 = vrot.slane %v63, %v71
  %v91 = vunpack.c.l.b16 %v41
  %v92 = vunpack.c.l.b16 %v42
  %v93 = vunpack.c.l.b16 %v43
  %v94 = vunpack.c.l.b16 %v44
  %v95 = vunpack.c.l.b16 %v45
  %v96 = vunpack.c.l.b16 %v46
  %v97 = vunpack.c.l.b16 %v47
  %v98 = vunpack.c.l.b16 %v48
  %v99 = vunpack.c.l.b16 %v49
  %v100 = vunpack.c.l.b16 %v50
  %v101 = vunpack.c.l.b16 %v51
  %v102 = vunpack.c.l.b16 %v52
  %v103 = vunpack.c.l.b16 %v53
  %v104 = vunpack.c.l.b16 %v54
  %v105 = vunpack.c.l.b16 %v55
  %v106 = vunpack.c.l.b16 %v56
  %v107 = vpack.c.b16 %v92, %v91
  %v108 = vpack.c.b16 %v94, %v93
  %v109 = vpack.c.b16 %v96, %v95
  %v110 = vpack.c.b16 %v98, %v97
  %v111 = vpack.c.b16 %v100, %v99
  %v112 = vpack.c.b16 %v102, %v101
  %v113 = vpack.c.b16 %v104, %v103
  %v114 = vpack.c.b16 %v106, %v105
  %v121 = vunpack.c.l.b16 %v57
  %v122 = vunpack.c.h.b16 %v57
  %v123 = vunpack.c.l.b16 %v58
  %v124 = vunpack.c.h.b16 %v58
  %v125 = vunpack.c.l.b16 %v59
  %v126 = vunpack.c.h.b16 %v59
  %v127 = vunpack.c.l.b16 %v60
  %v128 = vunpack.c.h.b16 %v60
  %v129 = vunpack.c.l.b16 %v61
  %v130 = vunpack.c.h.b16 %v61
  %v131 = vunpack.c.l.b16 %v62
  %v132 = vunpack.c.h.b16 %v62
  %v133 = vpack.c.b16 %v123, %v121
  %v134 = vpack.c.b16 %v124, %v122
  %v135 = vpack.c.b16 %v127, %v125
  %v136 = vpack.c.b16 %v128, %v126
  %v137 = vpack.c.b16 %v131, %v129
  %v138 = vpack.c.b16 %v132, %v130
  %vm145 = vcmask 392192
  %v147 = vsel %vm145, %v107, 0
  %v150 = vsel %vm145, %v108, 0
  %v153 = vsel %vm145, %v109, 0
  %v156 = vsel %vm145, %v110, 0
  %v159 = vsel %vm145, %v111, 0
  %v162 = vsel %vm145, %v112, 0
  %v165 = vsel %vm145, %v113, 0
  %v168 = vsel %vm145, %v114, 0
  %170 = vmatprep.subr.bf16.mxu0 0
  %171 = vmatpush1.bf16.msra.mxu0 0
  %172 = vmatprep.subr.bf16.mxu0 0
  %173 = vmatpush1.bf16.msra.mxu0 0
  %174 = vmatprep.subr.bf16.mxu0 0
  %175 = vmatpush1.bf16.msra.mxu0 0
  %176 = vmatprep.subr.bf16.mxu0 0
  %177 = vmatpush1.bf16.msra.mxu0 0
  %178 = vmatprep.subr.bf16.mxu0 0
  %179 = vmatpush1.bf16.msra.mxu0 0
  %180 = vmatprep.subr.bf16.mxu0 %v138
  %181 = vmatpush1.bf16.msra.mxu0 %v137
  %182 = vmatprep.subr.bf16.mxu0 %v136
  %183 = vmatpush1.bf16.msra.mxu0 %v135
  %184 = vmatprep.subr.bf16.mxu0 %v134
  %185 = vmatpush1.bf16.msra.mxu0 %v133
  %186 = vmatprep.subr.bf16.mxu0 0
  %187 = vmatpush2.bf16.msra.mxu0 0
  %188 = vmatprep.subr.bf16.mxu0 0
  %189 = vmatpush2.bf16.msra.mxu0 0
  %190 = vmatprep.subr.bf16.mxu0 0
  %191 = vmatpush2.bf16.msra.mxu0 0
  %192 = vmatprep.subr.bf16.mxu0 0
  %193 = vmatpush2.bf16.msra.mxu0 0
  %194 = vmatprep.subr.bf16.mxu0 0
  %195 = vmatpush2.bf16.msra.mxu0 0
  %196 = vmatprep.subr.bf16.mxu0 0
  %197 = vmatpush2.bf16.msra.mxu0 0
  %198 = vmatprep.subr.bf16.mxu0 0
  %199 = vmatpush2.bf16.msra.mxu0 0
  %200 = vmatprep.subr.bf16.mxu0 0
  %201 = vmatpush2.bf16.msra.mxu0 0
  %202 = vmatprep.mubr.bf16.mxu0 0
  %203 = vmatmul.mubr.bf16.gmra.mxu0 %v147
  %v204 = vpop.f32.mrf.mxu0
  %v205 = vadd.f32 %v68, %v204
  %v206 = vpop.f32.mrf.mxu0
  %v207 = vadd.f32 %v72, %v206
  %v208 = vpop.f32.mrf.mxu0
  %v209 = vadd.f32 %v68, %v208
  %v210 = vpop.f32.mrf.mxu0
  %v211 = vadd.f32 %v72, %v210
  %212 = vmatprep.mubr.bf16.mxu0 0
  %213 = vmatmul.mubr.bf16.gmra.mxu0 %v150
  %v214 = vpop.f32.mrf.mxu0
  %v215 = vadd.f32 %v68, %v214
  %v216 = vpop.f32.mrf.mxu0
  %v217 = vadd.f32 %v72, %v216
  %v218 = vpop.f32.mrf.mxu0
  %v219 = vadd.f32 %v68, %v218
  %v220 = vpop.f32.mrf.mxu0
  %v221 = vadd.f32 %v72, %v220
  %222 = vmatprep.mubr.bf16.mxu0 0
  %223 = vmatmul.mubr.bf16.gmra.mxu0 %v153
  %v224 = vpop.f32.mrf.mxu0
  %v225 = vadd.f32 %v68, %v224
  %v226 = vpop.f32.mrf.mxu0
  %v227 = vadd.f32 %v72, %v226
  %v228 = vpop.f32.mrf.mxu0
  %v229 = vadd.f32 %v68, %v228
  %v230 = vpop.f32.mrf.mxu0
  %v231 = vadd.f32 %v72, %v230
  %232 = vmatprep.mubr.bf16.mxu0 0
  %233 = vmatmul.mubr.bf16.gmra.mxu0 %v156
  %v234 = vpop.f32.mrf.mxu0
  %v235 = vadd.f32 %v68, %v234
  %v236 = vpop.f32.mrf.mxu0
  %v237 = vadd.f32 %v72, %v236
  %v238 = vpop.f32.mrf.mxu0
  %v239 = vadd.f32 %v68, %v238
  %v240 = vpop.f32.mrf.mxu0
  %v241 = vadd.f32 %v72, %v240
  %242 = vmatprep.mubr.bf16.mxu0 0
  %243 = vmatmul.mubr.bf16.gmra.mxu0 %v159
  %v244 = vpop.f32.mrf.mxu0
  %v245 = vadd.f32 %v68, %v244
  %v246 = vpop.f32.mrf.mxu0
  %v247 = vadd.f32 %v72, %v246
  %v248 = vpop.f32.mrf.mxu0
  %v249 = vadd.f32 %v68, %v248
  %v250 = vpop.f32.mrf.mxu0
  %v251 = vadd.f32 %v72, %v250
  %252 = vmatprep.mubr.bf16.mxu0 0
  %253 = vmatmul.mubr.bf16.gmra.mxu0 %v162
  %v254 = vpop.f32.mrf.mxu0
  %v255 = vadd.f32 %v68, %v254
  %v256 = vpop.f32.mrf.mxu0
  %v257 = vadd.f32 %v72, %v256
  %v258 = vpop.f32.mrf.mxu0
  %v259 = vadd.f32 %v68, %v258
  %v260 = vpop.f32.mrf.mxu0
  %v261 = vadd.f32 %v72, %v260
  %262 = vmatprep.mubr.bf16.mxu0 0
  %263 = vmatmul.mubr.bf16.gmra.mxu0 %v165
  %v264 = vpop.f32.mrf.mxu0
  %v265 = vadd.f32 %v68, %v264
  %v266 = vpop.f32.mrf.mxu0
  %v267 = vadd.f32 %v72, %v266
  %v268 = vpop.f32.mrf.mxu0
  %v269 = vadd.f32 %v68, %v268
  %v270 = vpop.f32.mrf.mxu0
  %v271 = vadd.f32 %v72, %v270
  %272 = vmatprep.mubr.bf16.mxu0 0
  %273 = vmatmul.mubr.bf16.gmra.mxu0 %v168
  %v274 = vpop.f32.mrf.mxu0
  %v275 = vadd.f32 %v68, %v274
  %v276 = vpop.f32.mrf.mxu0
  %v277 = vadd.f32 %v72, %v276
  %v278 = vpop.f32.mrf.mxu0
  %v279 = vadd.f32 %v68, %v278
  %v280 = vpop.f32.mrf.mxu0
  %v281 = vadd.f32 %v72, %v280
  %282 = vdwg.mxu0
  %v283 = vadd.f32 %v205, %v207
  %284 = vadd.xlane.f32.xlu0 %v283
  %v285 = vpop.xlane.xlu0 %284
  %v286 = vadd.f32 %v209, %v211
  %287 = vadd.xlane.f32.xlu0 %v286
  %v288 = vpop.xlane.xlu0 %287
  %v289 = vadd.f32 %v215, %v217
  %290 = vadd.xlane.f32.xlu0 %v289
  %v291 = vpop.xlane.xlu0 %290
  %v292 = vadd.f32 %v219, %v221
  %293 = vadd.xlane.f32.xlu0 %v292
  %v294 = vpop.xlane.xlu0 %293
  %v295 = vadd.f32 %v225, %v227
  %296 = vadd.xlane.f32.xlu0 %v295
  %v297 = vpop.xlane.xlu0 %296
  %v298 = vadd.f32 %v229, %v231
  %299 = vadd.xlane.f32.xlu0 %v298
  %v300 = vpop.xlane.xlu0 %299
  %v301 = vadd.f32 %v235, %v237
  %302 = vadd.xlane.f32.xlu0 %v301
  %v303 = vpop.xlane.xlu0 %302
  %v304 = vadd.f32 %v239, %v241
  %305 = vadd.xlane.f32.xlu0 %v304
  %v306 = vpop.xlane.xlu0 %305
  %v307 = vadd.f32 %v245, %v247
  %308 = vadd.xlane.f32.xlu0 %v307
  %v309 = vpop.xlane.xlu0 %308
  %v310 = vadd.f32 %v249, %v251
  %311 = vadd.xlane.f32.xlu0 %v310
  %v312 = vpop.xlane.xlu0 %311
  %v313 = vadd.f32 %v255, %v257
  %314 = vadd.xlane.f32.xlu0 %v313
  %v315 = vpop.xlane.xlu0 %314
  %v316 = vadd.f32 %v259, %v261
  %317 = vadd.xlane.f32.xlu0 %v316
  %v318 = vpop.xlane.xlu0 %317
  %v319 = vadd.f32 %v265, %v267
  %320 = vadd.xlane.f32.xlu0 %v319
  %v321 = vpop.xlane.xlu0 %320
  %v322 = vadd.f32 %v269, %v271
  %323 = vadd.xlane.f32.xlu0 %v322
  %v324 = vpop.xlane.xlu0 %323
  %v325 = vadd.f32 %v275, %v277
  %326 = vadd.xlane.f32.xlu0 %v325
  %v327 = vpop.xlane.xlu0 %326
  %v328 = vadd.f32 %v279, %v281
  %329 = vadd.xlane.f32.xlu0 %v328
  %v330 = vpop.xlane.xlu0 %329
  %v331 = vrcp.pop 256.0
  %v332 = vmul.f32 %v285, %v331
  %v333 = vmul.f32 %v288, %v331
  %v334 = vmul.f32 %v291, %v331
  %v335 = vmul.f32 %v294, %v331
  %v336 = vmul.f32 %v297, %v331
  %v337 = vmul.f32 %v300, %v331
  %v338 = vmul.f32 %v303, %v331
  %v339 = vmul.f32 %v306, %v331
  %v340 = vmul.f32 %v309, %v331
  %v341 = vmul.f32 %v312, %v331
  %v342 = vmul.f32 %v315, %v331
  %v343 = vmul.f32 %v318, %v331
  %v344 = vmul.f32 %v321, %v331
  %v345 = vmul.f32 %v324, %v331
  %v346 = vmul.f32 %v327, %v331
  %v347 = vmul.f32 %v330, %v331
  %v348 = vmul.f32 %v205, %v205
  %v349 = vmul.f32 %v207, %v207
  %v350 = vmul.f32 %v209, %v209
  %v351 = vmul.f32 %v211, %v211
  %v352 = vmul.f32 %v215, %v215
  %v353 = vmul.f32 %v217, %v217
  %v354 = vmul.f32 %v219, %v219
  %v355 = vmul.f32 %v221, %v221
  %v356 = vmul.f32 %v225, %v225
  %v357 = vmul.f32 %v227, %v227
  %v358 = vmul.f32 %v229, %v229
  %v359 = vmul.f32 %v231, %v231
  %v360 = vmul.f32 %v235, %v235
  %v361 = vmul.f32 %v237, %v237
  %v362 = vmul.f32 %v239, %v239
  %v363 = vmul.f32 %v241, %v241
  %v364 = vmul.f32 %v245, %v245
  %v365 = vmul.f32 %v247, %v247
  %v366 = vmul.f32 %v249, %v249
  %v367 = vmul.f32 %v251, %v251
  %v368 = vmul.f32 %v255, %v255
  %v369 = vmul.f32 %v257, %v257
  %v370 = vmul.f32 %v259, %v259
  %v371 = vmul.f32 %v261, %v261
  %v372 = vmul.f32 %v265, %v265
  %v373 = vmul.f32 %v267, %v267
  %v374 = vmul.f32 %v269, %v269
  %v375 = vmul.f32 %v271, %v271
  %v376 = vmul.f32 %v275, %v275
  %v377 = vmul.f32 %v277, %v277
  %v378 = vmul.f32 %v279, %v279
  %v379 = vmul.f32 %v281, %v281
  %v380 = vadd.f32 %v348, %v349
  %381 = vadd.xlane.f32.xlu0 %v380
  %v382 = vpop.xlane.xlu0 %381
  %v383 = vadd.f32 %v350, %v351
  %384 = vadd.xlane.f32.xlu0 %v383
  %v385 = vpop.xlane.xlu0 %384
  %v386 = vadd.f32 %v352, %v353
  %387 = vadd.xlane.f32.xlu0 %v386
  %v388 = vpop.xlane.xlu0 %387
  %v389 = vadd.f32 %v354, %v355
  %390 = vadd.xlane.f32.xlu0 %v389
  %v391 = vpop.xlane.xlu0 %390
  %v392 = vadd.f32 %v356, %v357
  %393 = vadd.xlane.f32.xlu0 %v392
  %v394 = vpop.xlane.xlu0 %393
  %v395 = vadd.f32 %v358, %v359
  %396 = vadd.xlane.f32.xlu0 %v395
  %v397 = vpop.xlane.xlu0 %396
  %v398 = vadd.f32 %v360, %v361
  %399 = vadd.xlane.f32.xlu0 %v398
  %v400 = vpop.xlane.xlu0 %399
  %v401 = vadd.f32 %v362, %v363
  %402 = vadd.xlane.f32.xlu0 %v401
  %v403 = vpop.xlane.xlu0 %402
  %v404 = vadd.f32 %v364, %v365
  %405 = vadd.xlane.f32.xlu0 %v404
  %v406 = vpop.xlane.xlu0 %405
  %v407 = vadd.f32 %v366, %v367
  %408 = vadd.xlane.f32.xlu0 %v407
  %v409 = vpop.xlane.xlu0 %408
  %v410 = vadd.f32 %v368, %v369
  %411 = vadd.xlane.f32.xlu0 %v410
  %v412 = vpop.xlane.xlu0 %411
  %v413 = vadd.f32 %v370, %v371
  %414 = vadd.xlane.f32.xlu0 %v413
  %v415 = vpop.xlane.xlu0 %414
  %v416 = vadd.f32 %v372, %v373
  %417 = vadd.xlane.f32.xlu0 %v416
  %v418 = vpop.xlane.xlu0 %417
  %v419 = vadd.f32 %v374, %v375
  %420 = vadd.xlane.f32.xlu0 %v419
  %v421 = vpop.xlane.xlu0 %420
  %v422 = vadd.f32 %v376, %v377
  %423 = vadd.xlane.f32.xlu0 %v422
  %v424 = vpop.xlane.xlu0 %423
  %v425 = vadd.f32 %v378, %v379
  %426 = vadd.xlane.f32.xlu0 %v425
  %v427 = vpop.xlane.xlu0 %426
  %v428 = vmul.f32 %v382, %v331
  %v429 = vmul.f32 %v385, %v331
  %v430 = vmul.f32 %v388, %v331
  %v431 = vmul.f32 %v391, %v331
  %v432 = vmul.f32 %v394, %v331
  %v433 = vmul.f32 %v397, %v331
  %v434 = vmul.f32 %v400, %v331
  %v435 = vmul.f32 %v403, %v331
  %v436 = vmul.f32 %v406, %v331
  %v437 = vmul.f32 %v409, %v331
  %v438 = vmul.f32 %v412, %v331
  %v439 = vmul.f32 %v415, %v331
  %v440 = vmul.f32 %v418, %v331
  %v441 = vmul.f32 %v421, %v331
  %v442 = vmul.f32 %v424, %v331
  %v443 = vmul.f32 %v427, %v331
  %v444 = vmul.f32 %v332, %v332
  %v445 = vmul.f32 %v333, %v333
  %v446 = vmul.f32 %v334, %v334
  %v447 = vmul.f32 %v335, %v335
  %v448 = vmul.f32 %v336, %v336
  %v449 = vmul.f32 %v337, %v337
  %v450 = vmul.f32 %v338, %v338
  %v451 = vmul.f32 %v339, %v339
  %v452 = vmul.f32 %v340, %v340
  %v453 = vmul.f32 %v341, %v341
  %v454 = vmul.f32 %v342, %v342
  %v455 = vmul.f32 %v343, %v343
  %v456 = vmul.f32 %v344, %v344
  %v457 = vmul.f32 %v345, %v345
  %v458 = vmul.f32 %v346, %v346
  %v459 = vmul.f32 %v347, %v347
  %v460 = vsub.f32 %v428, %v444
  %v461 = vsub.f32 %v429, %v445
  %v462 = vsub.f32 %v430, %v446
  %v463 = vsub.f32 %v431, %v447
  %v464 = vsub.f32 %v432, %v448
  %v465 = vsub.f32 %v433, %v449
  %v466 = vsub.f32 %v434, %v450
  %v467 = vsub.f32 %v435, %v451
  %v468 = vsub.f32 %v436, %v452
  %v469 = vsub.f32 %v437, %v453
  %v470 = vsub.f32 %v438, %v454
  %v471 = vsub.f32 %v439, %v455
  %v472 = vsub.f32 %v440, %v456
  %v473 = vsub.f32 %v441, %v457
  %v474 = vsub.f32 %v442, %v458
  %v475 = vsub.f32 %v443, %v459
  %v476 = vadd.f32 %v460, 1e-06
  %v477 = vadd.f32 %v461, 1e-06
  %v478 = vadd.f32 %v462, 1e-06
  %v479 = vadd.f32 %v463, 1e-06
  %v480 = vadd.f32 %v464, 1e-06
  %v481 = vadd.f32 %v465, 1e-06
  %v482 = vadd.f32 %v466, 1e-06
  %v483 = vadd.f32 %v467, 1e-06
  %v484 = vadd.f32 %v468, 1e-06
  %v485 = vadd.f32 %v469, 1e-06
  %v486 = vadd.f32 %v470, 1e-06
  %v487 = vadd.f32 %v471, 1e-06
  %v488 = vadd.f32 %v472, 1e-06
  %v489 = vadd.f32 %v473, 1e-06
  %v490 = vadd.f32 %v474, 1e-06
  %v491 = vadd.f32 %v475, 1e-06
  %v492 = vrsqrt.pop %v476
  %v493 = vrsqrt.pop %v477
  %v494 = vrsqrt.pop %v478
  %v495 = vrsqrt.pop %v479
  %v496 = vrsqrt.pop %v480
  %v497 = vrsqrt.pop %v481
  %v498 = vrsqrt.pop %v482
  %v499 = vrsqrt.pop %v483
  %v500 = vrsqrt.pop %v484
  %v501 = vrsqrt.pop %v485
  %v502 = vrsqrt.pop %v486
  %v503 = vrsqrt.pop %v487
  %v504 = vrsqrt.pop %v488
  %v505 = vrsqrt.pop %v489
  %v506 = vrsqrt.pop %v490
  %v507 = vrsqrt.pop %v491
  %v508 = vsub.f32 %v205, %v332
  %v509 = vsub.f32 %v207, %v332
  %v510 = vsub.f32 %v209, %v333
  %v511 = vsub.f32 %v211, %v333
  %v512 = vsub.f32 %v215, %v334
  %v513 = vsub.f32 %v217, %v334
  %v514 = vsub.f32 %v219, %v335
  %v515 = vsub.f32 %v221, %v335
  %v516 = vsub.f32 %v225, %v336
  %v517 = vsub.f32 %v227, %v336
  %v518 = vsub.f32 %v229, %v337
  %v519 = vsub.f32 %v231, %v337
  %v520 = vsub.f32 %v235, %v338
  %v521 = vsub.f32 %v237, %v338
  %v522 = vsub.f32 %v239, %v339
  %v523 = vsub.f32 %v241, %v339
  %v524 = vsub.f32 %v245, %v340
  %v525 = vsub.f32 %v247, %v340
  %v526 = vsub.f32 %v249, %v341
  %v527 = vsub.f32 %v251, %v341
  %v528 = vsub.f32 %v255, %v342
  %v529 = vsub.f32 %v257, %v342
  %v530 = vsub.f32 %v259, %v343
  %v531 = vsub.f32 %v261, %v343
  %v532 = vsub.f32 %v265, %v344
  %v533 = vsub.f32 %v267, %v344
  %v534 = vsub.f32 %v269, %v345
  %v535 = vsub.f32 %v271, %v345
  %v536 = vsub.f32 %v275, %v346
  %v537 = vsub.f32 %v277, %v346
  %v538 = vsub.f32 %v279, %v347
  %v539 = vsub.f32 %v281, %v347
  %v540 = vmul.f32 %v508, %v492
  %v541 = vmul.f32 %v509, %v492
  %v542 = vmul.f32 %v510, %v493
  %v543 = vmul.f32 %v511, %v493
  %v544 = vmul.f32 %v512, %v494
  %v545 = vmul.f32 %v513, %v494
  %v546 = vmul.f32 %v514, %v495
  %v547 = vmul.f32 %v515, %v495
  %v548 = vmul.f32 %v516, %v496
  %v549 = vmul.f32 %v517, %v496
  %v550 = vmul.f32 %v518, %v497
  %v551 = vmul.f32 %v519, %v497
  %v552 = vmul.f32 %v520, %v498
  %v553 = vmul.f32 %v521, %v498
  %v554 = vmul.f32 %v522, %v499
  %v555 = vmul.f32 %v523, %v499
  %v556 = vmul.f32 %v524, %v500
  %v557 = vmul.f32 %v525, %v500
  %v558 = vmul.f32 %v526, %v501
  %v559 = vmul.f32 %v527, %v501
  %v560 = vmul.f32 %v528, %v502
  %v561 = vmul.f32 %v529, %v502
  %v562 = vmul.f32 %v530, %v503
  %v563 = vmul.f32 %v531, %v503
  %v564 = vmul.f32 %v532, %v504
  %v565 = vmul.f32 %v533, %v504
  %v566 = vmul.f32 %v534, %v505
  %v567 = vmul.f32 %v535, %v505
  %v568 = vmul.f32 %v536, %v506
  %v569 = vmul.f32 %v537, %v506
  %v570 = vmul.f32 %v538, %v507
  %v571 = vmul.f32 %v539, %v507
  %v572 = vld [vmem:[%s3] sm:$0x3]
  %v574 = vlaneseq
  %v575 = vshrl.u32 %v574, 7
  %v576 = vsub.s32 0, %v575
  %v577 = vrot.slane %v572, %v576
  %v578 = vlaneseq
  %v579 = vshrl.u32 %v578, 7
  %v580 = vsub.s32 1, %v579
  %v581 = vrot.slane %v572, %v580
  %v584 = vmul.f32 %v540, %v577
  %v585 = vmul.f32 %v541, %v581
  %v586 = vmul.f32 %v542, %v577
  %v587 = vmul.f32 %v543, %v581
  %v588 = vmul.f32 %v544, %v577
  %v589 = vmul.f32 %v545, %v581
  %v590 = vmul.f32 %v546, %v577
  %v591 = vmul.f32 %v547, %v581
  %v592 = vmul.f32 %v548, %v577
  %v593 = vmul.f32 %v549, %v581
  %v594 = vmul.f32 %v550, %v577
  %v595 = vmul.f32 %v551, %v581
  %v596 = vmul.f32 %v552, %v577
  %v597 = vmul.f32 %v553, %v581
  %v598 = vmul.f32 %v554, %v577
  %v599 = vmul.f32 %v555, %v581
  %v600 = vmul.f32 %v556, %v577
  %v601 = vmul.f32 %v557, %v581
  %v602 = vmul.f32 %v558, %v577
  %v603 = vmul.f32 %v559, %v581
  %v604 = vmul.f32 %v560, %v577
  %v605 = vmul.f32 %v561, %v581
  %v606 = vmul.f32 %v562, %v577
  %v607 = vmul.f32 %v563, %v581
  %v608 = vmul.f32 %v564, %v577
  %v609 = vmul.f32 %v565, %v581
  %v610 = vmul.f32 %v566, %v577
  %v611 = vmul.f32 %v567, %v581
  %v612 = vmul.f32 %v568, %v577
  %v613 = vmul.f32 %v569, %v581
  %v614 = vmul.f32 %v570, %v577
  %v615 = vmul.f32 %v571, %v581
  %v616 = vld [vmem:[%s4] sm:$0x3]
  %v618 = vlaneseq
  %v619 = vshrl.u32 %v618, 7
  %v620 = vsub.s32 0, %v619
  %v621 = vrot.slane %v616, %v620
  %v622 = vlaneseq
  %v623 = vshrl.u32 %v622, 7
  %v624 = vsub.s32 1, %v623
  %v625 = vrot.slane %v616, %v624
  %v628 = vadd.f32 %v584, %v621
  %v629 = vadd.f32 %v585, %v625
  %v630 = vadd.f32 %v586, %v621
  %v631 = vadd.f32 %v587, %v625
  %v632 = vadd.f32 %v588, %v621
  %v633 = vadd.f32 %v589, %v625
  %v634 = vadd.f32 %v590, %v621
  %v635 = vadd.f32 %v591, %v625
  %v636 = vadd.f32 %v592, %v621
  %v637 = vadd.f32 %v593, %v625
  %v638 = vadd.f32 %v594, %v621
  %v639 = vadd.f32 %v595, %v625
  %v640 = vadd.f32 %v596, %v621
  %v641 = vadd.f32 %v597, %v625
  %v642 = vadd.f32 %v598, %v621
  %v643 = vadd.f32 %v599, %v625
  %v644 = vadd.f32 %v600, %v621
  %v645 = vadd.f32 %v601, %v625
  %v646 = vadd.f32 %v602, %v621
  %v647 = vadd.f32 %v603, %v625
  %v648 = vadd.f32 %v604, %v621
  %v649 = vadd.f32 %v605, %v625
  %v650 = vadd.f32 %v606, %v621
  %v651 = vadd.f32 %v607, %v625
  %v652 = vadd.f32 %v608, %v621
  %v653 = vadd.f32 %v609, %v625
  %v654 = vadd.f32 %v610, %v621
  %v655 = vadd.f32 %v611, %v625
  %v656 = vadd.f32 %v612, %v621
  %v657 = vadd.f32 %v613, %v625
  %v658 = vadd.f32 %v614, %v621
  %v659 = vadd.f32 %v615, %v625
  %v660 = vld [vmem:[%s9] sm:$0xff]
  %v661 = vld [vmem:[%s9 + $0x8] sm:$0xff]
  %v662 = vadd.f32 %v628, %v630
  %v663 = vrot.slane %v662, 4
  %v664 = vadd.f32 %v662, %v663
  %v665 = vrot.slane %v664, 2
  %v666 = vadd.f32 %v664, %v665
  %v667 = vrot.slane %v666, 1
  %v668 = vadd.f32 %v666, %v667
  %v669 = vadd.f32 %v629, %v631
  %v670 = vrot.slane %v669, 4
  %v671 = vadd.f32 %v669, %v670
  %v672 = vrot.slane %v671, 2
  %v673 = vadd.f32 %v671, %v672
  %v674 = vrot.slane %v673, 1
  %v675 = vadd.f32 %v673, %v674
  %v676 = vadd.f32 %v632, %v634
  %v677 = vrot.slane %v676, 4
  %v678 = vadd.f32 %v676, %v677
  %v679 = vrot.slane %v678, 2
  %v680 = vadd.f32 %v678, %v679
  %v681 = vrot.slane %v680, 1
  %v682 = vadd.f32 %v680, %v681
  %v683 = vadd.f32 %v633, %v635
  %v684 = vrot.slane %v683, 4
  %v685 = vadd.f32 %v683, %v684
  %v686 = vrot.slane %v685, 2
  %v687 = vadd.f32 %v685, %v686
  %v688 = vrot.slane %v687, 1
  %v689 = vadd.f32 %v687, %v688
  %v690 = vadd.f32 %v636, %v638
  %v691 = vrot.slane %v690, 4
  %v692 = vadd.f32 %v690, %v691
  %v693 = vrot.slane %v692, 2
  %v694 = vadd.f32 %v692, %v693
  %v695 = vrot.slane %v694, 1
  %v696 = vadd.f32 %v694, %v695
  %v697 = vadd.f32 %v637, %v639
  %v698 = vrot.slane %v697, 4
  %v699 = vadd.f32 %v697, %v698
  %v700 = vrot.slane %v699, 2
  %v701 = vadd.f32 %v699, %v700
  %v702 = vrot.slane %v701, 1
  %v703 = vadd.f32 %v701, %v702
  %v704 = vadd.f32 %v640, %v642
  %v705 = vrot.slane %v704, 4
  %v706 = vadd.f32 %v704, %v705
  %v707 = vrot.slane %v706, 2
  %v708 = vadd.f32 %v706, %v707
  %v709 = vrot.slane %v708, 1
  %v710 = vadd.f32 %v708, %v709
  %v711 = vadd.f32 %v641, %v643
  %v712 = vrot.slane %v711, 4
  %v713 = vadd.f32 %v711, %v712
  %v714 = vrot.slane %v713, 2
  %v715 = vadd.f32 %v713, %v714
  %v716 = vrot.slane %v715, 1
  %v717 = vadd.f32 %v715, %v716
  %v718 = vadd.f32 %v644, %v646
  %v719 = vrot.slane %v718, 4
  %v720 = vadd.f32 %v718, %v719
  %v721 = vrot.slane %v720, 2
  %v722 = vadd.f32 %v720, %v721
  %v723 = vrot.slane %v722, 1
  %v724 = vadd.f32 %v722, %v723
  %v725 = vadd.f32 %v645, %v647
  %v726 = vrot.slane %v725, 4
  %v727 = vadd.f32 %v725, %v726
  %v728 = vrot.slane %v727, 2
  %v729 = vadd.f32 %v727, %v728
  %v730 = vrot.slane %v729, 1
  %v731 = vadd.f32 %v729, %v730
  %v732 = vadd.f32 %v648, %v650
  %v733 = vrot.slane %v732, 4
  %v734 = vadd.f32 %v732, %v733
  %v735 = vrot.slane %v734, 2
  %v736 = vadd.f32 %v734, %v735
  %v737 = vrot.slane %v736, 1
  %v738 = vadd.f32 %v736, %v737
  %v739 = vadd.f32 %v649, %v651
  %v740 = vrot.slane %v739, 4
  %v741 = vadd.f32 %v739, %v740
  %v742 = vrot.slane %v741, 2
  %v743 = vadd.f32 %v741, %v742
  %v744 = vrot.slane %v743, 1
  %v745 = vadd.f32 %v743, %v744
  %v746 = vadd.f32 %v652, %v654
  %v747 = vrot.slane %v746, 4
  %v748 = vadd.f32 %v746, %v747
  %v749 = vrot.slane %v748, 2
  %v750 = vadd.f32 %v748, %v749
  %v751 = vrot.slane %v750, 1
  %v752 = vadd.f32 %v750, %v751
  %v753 = vadd.f32 %v653, %v655
  %v754 = vrot.slane %v753, 4
  %v755 = vadd.f32 %v753, %v754
  %v756 = vrot.slane %v755, 2
  %v757 = vadd.f32 %v755, %v756
  %v758 = vrot.slane %v757, 1
  %v759 = vadd.f32 %v757, %v758
  %v760 = vadd.f32 %v656, %v658
  %v761 = vrot.slane %v760, 4
  %v762 = vadd.f32 %v760, %v761
  %v763 = vrot.slane %v762, 2
  %v764 = vadd.f32 %v762, %v763
  %v765 = vrot.slane %v764, 1
  %v766 = vadd.f32 %v764, %v765
  %v767 = vadd.f32 %v657, %v659
  %v768 = vrot.slane %v767, 4
  %v769 = vadd.f32 %v767, %v768
  %v770 = vrot.slane %v769, 2
  %v771 = vadd.f32 %v769, %v770
  %v772 = vrot.slane %v771, 1
  %v773 = vadd.f32 %v771, %v772
  %vm790 = vcmask 1041409
  %v791 = vsel %vm790, %v682, %v668
  %vm792 = vcmask 1042434
  %v793 = vsel %vm792, %v696, %v791
  %vm794 = vcmask 1043459
  %v795 = vsel %vm794, %v710, %v793
  %vm796 = vcmask 1044484
  %v797 = vsel %vm796, %v724, %v795
  %vm798 = vcmask 1045509
  %v799 = vsel %vm798, %v738, %v797
  %vm800 = vcmask 1046534
  %v801 = vsel %vm800, %v752, %v799
  %vm802 = vcmask 1047559
  %v803 = vsel %vm802, %v766, %v801
  %v804 = vsel %vm790, %v689, %v675
  %v805 = vsel %vm792, %v703, %v804
  %v806 = vsel %vm794, %v717, %v805
  %v807 = vsel %vm796, %v731, %v806
  %v808 = vsel %vm798, %v745, %v807
  %v809 = vsel %vm800, %v759, %v808
  %v810 = vsel %vm802, %v773, %v809
  %v813 = vadd.f32 %v660, %v803
  %v814 = vadd.f32 %v661, %v810
  %815 = vst [vmem:[%s9] sm:$0xff] %v813
  %816 = vst [vmem:[%s9 + $0x8] sm:$0xff] %v814
  // Predicated region
  $region42: #{_lambda_.1} parent=0 // pred_check
    %p817 = pneg %p35
  $region43: #{_lambda_.1} parent=0 // pred_check_branch
    %819 = sbr.rel (%p817) target = $region45
  $region44: #{_lambda_.1} parent=0 // pred_region
    %v820 = vld [vmem:[%s9] sm:$0xff]
    %v821 = vld [vmem:[%s9 + $0x8] sm:$0xff]
    %v822 = vpack.c.bf16 %v820, %v820
    %v823 = vpack.c.bf16 %v821, %v821
    %v824 = vld [vmem:[%s5] sm:$0xff]
    %v825 = vld [vmem:[%s5 + $0x8] sm:$0xff]
    %v826 = vld [vmem:[%s5 + $0x10] sm:$0xff]
    %v827 = vld [vmem:[%s5 + $0x18] sm:$0xff]
    %v828 = vld [vmem:[%s5 + $0x20] sm:$0xff]
    %v829 = vld [vmem:[%s5 + $0x28] sm:$0xff]
    %v830 = vld [vmem:[%s5 + $0x30] sm:$0xff]
    %v831 = vld [vmem:[%s5 + $0x38] sm:$0xff]
    %v832 = vld [vmem:[%s5 + $0x40] sm:$0xff]
    %v833 = vld [vmem:[%s5 + $0x48] sm:$0xff]
    %v834 = vld [vmem:[%s5 + $0x50] sm:$0xff]
    %v835 = vld [vmem:[%s5 + $0x58] sm:$0xff]
    %v836 = vld [vmem:[%s5 + $0x60] sm:$0xff]
    %v837 = vld [vmem:[%s5 + $0x68] sm:$0xff]
    %v838 = vld [vmem:[%s5 + $0x70] sm:$0xff]
    %v839 = vld [vmem:[%s5 + $0x78] sm:$0xff]
    %v840 = vld [vmem:[%s5 + $0x80] sm:$0xff]
    %v841 = vld [vmem:[%s5 + $0x88] sm:$0xff]
    %v842 = vld [vmem:[%s5 + $0x90] sm:$0xff]
    %v843 = vld [vmem:[%s5 + $0x98] sm:$0xff]
    %v844 = vld [vmem:[%s5 + $0xa0] sm:$0xff]
    %v845 = vld [vmem:[%s5 + $0xa8] sm:$0xff]
    %v846 = vld [vmem:[%s5 + $0xb0] sm:$0xff]
    %v847 = vld [vmem:[%s5 + $0xb8] sm:$0xff]
    %v848 = vld [vmem:[%s5 + $0xc0] sm:$0xff]
    %v849 = vld [vmem:[%s5 + $0xc8] sm:$0xff]
    %v850 = vld [vmem:[%s5 + $0xd0] sm:$0xff]
    %v851 = vld [vmem:[%s5 + $0xd8] sm:$0xff]
    %v852 = vld [vmem:[%s5 + $0xe0] sm:$0xff]
    %v853 = vld [vmem:[%s5 + $0xe8] sm:$0xff]
    %v854 = vld [vmem:[%s5 + $0xf0] sm:$0xff]
    %v855 = vld [vmem:[%s5 + $0xf8] sm:$0xff]
    %v856 = vld [vmem:[%s5 + $0x100] sm:$0xff]
    %v857 = vld [vmem:[%s5 + $0x108] sm:$0xff]
    %v858 = vld [vmem:[%s5 + $0x110] sm:$0xff]
    %v859 = vld [vmem:[%s5 + $0x118] sm:$0xff]
    %v860 = vld [vmem:[%s5 + $0x120] sm:$0xff]
    %v861 = vld [vmem:[%s5 + $0x128] sm:$0xff]
    %v862 = vld [vmem:[%s5 + $0x130] sm:$0xff]
    %v863 = vld [vmem:[%s5 + $0x138] sm:$0xff]
    %v864 = vld [vmem:[%s5 + $0x140] sm:$0xff]
    %v865 = vld [vmem:[%s5 + $0x148] sm:$0xff]
    %v866 = vld [vmem:[%s5 + $0x150] sm:$0xff]
    %v867 = vld [vmem:[%s5 + $0x158] sm:$0xff]
    %v868 = vld [vmem:[%s5 + $0x160] sm:$0xff]
    %v869 = vld [vmem:[%s5 + $0x168] sm:$0xff]
    %v870 = vld [vmem:[%s5 + $0x170] sm:$0xff]
    %v871 = vld [vmem:[%s5 + $0x178] sm:$0xff]
    %v872 = vld [vmem:[%s5 + $0x180] sm:$0xff]
    %v873 = vld [vmem:[%s5 + $0x188] sm:$0xff]
    %v874 = vld [vmem:[%s5 + $0x190] sm:$0xff]
    %v875 = vld [vmem:[%s5 + $0x198] sm:$0xff]
    %v876 = vld [vmem:[%s5 + $0x1a0] sm:$0xff]
    %v877 = vld [vmem:[%s5 + $0x1a8] sm:$0xff]
    %v878 = vld [vmem:[%s5 + $0x1b0] sm:$0xff]
    %v879 = vld [vmem:[%s5 + $0x1b8] sm:$0xff]
    %v880 = vld [vmem:[%s5 + $0x1c0] sm:$0xff]
    %v881 = vld [vmem:[%s5 + $0x1c8] sm:$0xff]
    %v882 = vld [vmem:[%s5 + $0x1d0] sm:$0xff]
    %v883 = vld [vmem:[%s5 + $0x1d8] sm:$0xff]
    %v884 = vld [vmem:[%s5 + $0x1e0] sm:$0xff]
    %v885 = vld [vmem:[%s5 + $0x1e8] sm:$0xff]
    %v886 = vld [vmem:[%s5 + $0x1f0] sm:$0xff]
    %v887 = vld [vmem:[%s5 + $0x1f8] sm:$0xff]
    %v888 = vld [vmem:[%s6] sm:$0xf]
    %v890 = vlaneseq
    %v891 = vshrl.u32 %v890, 7
    %v892 = vsub.s32 0, %v891
    %v893 = vrot.slane %v888, %v892
    %v894 = vlaneseq
    %v895 = vshrl.u32 %v894, 7
    %v896 = vsub.s32 1, %v895
    %v897 = vrot.slane %v888, %v896
    %v898 = vlaneseq
    %v899 = vshrl.u32 %v898, 7
    %v900 = vsub.s32 2, %v899
    %v901 = vrot.slane %v888, %v900
    %v902 = vlaneseq
    %v903 = vshrl.u32 %v902, 7
    %v904 = vsub.s32 3, %v903
    %v905 = vrot.slane %v888, %v904
    %v974 = vunpack.c.l.b16 %v824
    %v975 = vunpack.c.h.b16 %v824
    %v976 = vunpack.c.l.b16 %v825
    %v977 = vunpack.c.h.b16 %v825
    %v978 = vunpack.c.l.b16 %v826
    %v979 = vunpack.c.h.b16 %v826
    %v980 = vunpack.c.l.b16 %v827
    %v981 = vunpack.c.h.b16 %v827
    %v982 = vunpack.c.l.b16 %v828
    %v983 = vunpack.c.h.b16 %v828
    %v984 = vunpack.c.l.b16 %v829
    %v985 = vunpack.c.h.b16 %v829
    %v986 = vunpack.c.l.b16 %v830
    %v987 = vunpack.c.h.b16 %v830
    %v988 = vunpack.c.l.b16 %v831
    %v989 = vunpack.c.h.b16 %v831
    %v990 = vunpack.c.l.b16 %v832
    %v991 = vunpack.c.h.b16 %v832
    %v992 = vunpack.c.l.b16 %v833
    %v993 = vunpack.c.h.b16 %v833
    %v994 = vunpack.c.l.b16 %v834
    %v995 = vunpack.c.h.b16 %v834
    %v996 = vunpack.c.l.b16 %v835
    %v997 = vunpack.c.h.b16 %v835
    %v998 = vunpack.c.l.b16 %v836
    %v999 = vunpack.c.h.b16 %v836
    %v1000 = vunpack.c.l.b16 %v837
    %v1001 = vunpack.c.h.b16 %v837
    %v1002 = vunpack.c.l.b16 %v838
    %v1003 = vunpack.c.h.b16 %v838
    %v1004 = vunpack.c.l.b16 %v839
    %v1005 = vunpack.c.h.b16 %v839
    %v1006 = vunpack.c.l.b16 %v840
    %v1007 = vunpack.c.h.b16 %v840
    %v1008 = vunpack.c.l.b16 %v841
    %v1009 = vunpack.c.h.b16 %v841
    %v1010 = vunpack.c.l.b16 %v842
    %v1011 = vunpack.c.h.b16 %v842
    %v1012 = vunpack.c.l.b16 %v843
    %v1013 = vunpack.c.h.b16 %v843
    %v1014 = vunpack.c.l.b16 %v844
    %v1015 = vunpack.c.h.b16 %v844
    %v1016 = vunpack.c.l.b16 %v845
    %v1017 = vunpack.c.h.b16 %v845
    %v1018 = vunpack.c.l.b16 %v846
    %v1019 = vunpack.c.h.b16 %v846
    %v1020 = vunpack.c.l.b16 %v847
    %v1021 = vunpack.c.h.b16 %v847
    %v1022 = vunpack.c.l.b16 %v848
    %v1023 = vunpack.c.h.b16 %v848
    %v1024 = vunpack.c.l.b16 %v849
    %v1025 = vunpack.c.h.b16 %v849
    %v1026 = vunpack.c.l.b16 %v850
    %v1027 = vunpack.c.h.b16 %v850
    %v1028 = vunpack.c.l.b16 %v851
    %v1029 = vunpack.c.h.b16 %v851
    %v1030 = vunpack.c.l.b16 %v852
    %v1031 = vunpack.c.h.b16 %v852
    %v1032 = vunpack.c.l.b16 %v853
    %v1033 = vunpack.c.h.b16 %v853
    %v1034 = vunpack.c.l.b16 %v854
    %v1035 = vunpack.c.h.b16 %v854
    %v1036 = vunpack.c.l.b16 %v855
    %v1037 = vunpack.c.h.b16 %v855
    %v1038 = vunpack.c.l.b16 %v856
    %v1039 = vunpack.c.h.b16 %v856
    %v1040 = vunpack.c.l.b16 %v857
    %v1041 = vunpack.c.h.b16 %v857
    %v1042 = vunpack.c.l.b16 %v858
    %v1043 = vunpack.c.h.b16 %v858
    %v1044 = vunpack.c.l.b16 %v859
    %v1045 = vunpack.c.h.b16 %v859
    %v1046 = vunpack.c.l.b16 %v860
    %v1047 = vunpack.c.h.b16 %v860
    %v1048 = vunpack.c.l.b16 %v861
    %v1049 = vunpack.c.h.b16 %v861
    %v1050 = vunpack.c.l.b16 %v862
    %v1051 = vunpack.c.h.b16 %v862
    %v1052 = vunpack.c.l.b16 %v863
    %v1053 = vunpack.c.h.b16 %v863
    %v1054 = vunpack.c.l.b16 %v864
    %v1055 = vunpack.c.h.b16 %v864
    %v1056 = vunpack.c.l.b16 %v865
    %v1057 = vunpack.c.h.b16 %v865
    %v1058 = vunpack.c.l.b16 %v866
    %v1059 = vunpack.c.h.b16 %v866
    %v1060 = vunpack.c.l.b16 %v867
    %v1061 = vunpack.c.h.b16 %v867
    %v1062 = vunpack.c.l.b16 %v868
    %v1063 = vunpack.c.h.b16 %v868
    %v1064 = vunpack.c.l.b16 %v869
    %v1065 = vunpack.c.h.b16 %v869
    %v1066 = vunpack.c.l.b16 %v870
    %v1067 = vunpack.c.h.b16 %v870
    %v1068 = vunpack.c.l.b16 %v871
    %v1069 = vunpack.c.h.b16 %v871
    %v1070 = vunpack.c.l.b16 %v872
    %v1071 = vunpack.c.h.b16 %v872
    %v1072 = vunpack.c.l.b16 %v873
    %v1073 = vunpack.c.h.b16 %v873
    %v1074 = vunpack.c.l.b16 %v874
    %v1075 = vunpack.c.h.b16 %v874
    %v1076 = vunpack.c.l.b16 %v875
    %v1077 = vunpack.c.h.b16 %v875
    %v1078 = vunpack.c.l.b16 %v876
    %v1079 = vunpack.c.h.b16 %v876
    %v1080 = vunpack.c.l.b16 %v877
    %v1081 = vunpack.c.h.b16 %v877
    %v1082 = vunpack.c.l.b16 %v878
    %v1083 = vunpack.c.h.b16 %v878
    %v1084 = vunpack.c.l.b16 %v879
    %v1085 = vunpack.c.h.b16 %v879
    %v1086 = vunpack.c.l.b16 %v880
    %v1087 = vunpack.c.h.b16 %v880
    %v1088 = vunpack.c.l.b16 %v881
    %v1089 = vunpack.c.h.b16 %v881
    %v1090 = vunpack.c.l.b16 %v882
    %v1091 = vunpack.c.h.b16 %v882
    %v1092 = vunpack.c.l.b16 %v883
    %v1093 = vunpack.c.h.b16 %v883
    %v1094 = vunpack.c.l.b16 %v884
    %v1095 = vunpack.c.h.b16 %v884
    %v1096 = vunpack.c.l.b16 %v885
    %v1097 = vunpack.c.h.b16 %v885
    %v1098 = vunpack.c.l.b16 %v886
    %v1099 = vunpack.c.h.b16 %v886
    %v1100 = vunpack.c.l.b16 %v887
    %v1101 = vunpack.c.h.b16 %v887
    %v1102 = vpack.c.b16 %v978, %v974
    %v1103 = vpack.c.b16 %v979, %v975
    %v1104 = vpack.c.b16 %v980, %v976
    %v1105 = vpack.c.b16 %v981, %v977
    %v1106 = vpack.c.b16 %v986, %v982
    %v1107 = vpack.c.b16 %v987, %v983
    %v1108 = vpack.c.b16 %v988, %v984
    %v1109 = vpack.c.b16 %v989, %v985
    %v1110 = vpack.c.b16 %v994, %v990
    %v1111 = vpack.c.b16 %v995, %v991
    %v1112 = vpack.c.b16 %v996, %v992
    %v1113 = vpack.c.b16 %v997, %v993
    %v1114 = vpack.c.b16 %v1002, %v998
    %v1115 = vpack.c.b16 %v1003, %v999
    %v1116 = vpack.c.b16 %v1004, %v1000
    %v1117 = vpack.c.b16 %v1005, %v1001
    %v1118 = vpack.c.b16 %v1010, %v1006
    %v1119 = vpack.c.b16 %v1011, %v1007
    %v1120 = vpack.c.b16 %v1012, %v1008
    %v1121 = vpack.c.b16 %v1013, %v1009
    %v1122 = vpack.c.b16 %v1018, %v1014
    %v1123 = vpack.c.b16 %v1019, %v1015
    %v1124 = vpack.c.b16 %v1020, %v1016
    %v1125 = vpack.c.b16 %v1021, %v1017
    %v1126 = vpack.c.b16 %v1026, %v1022
    %v1127 = vpack.c.b16 %v1027, %v1023
    %v1128 = vpack.c.b16 %v1028, %v1024
    %v1129 = vpack.c.b16 %v1029, %v1025
    %v1130 = vpack.c.b16 %v1034, %v1030
    %v1131 = vpack.c.b16 %v1035, %v1031
    %v1132 = vpack.c.b16 %v1036, %v1032
    %v1133 = vpack.c.b16 %v1037, %v1033
    %v1134 = vpack.c.b16 %v1042, %v1038
    %v1135 = vpack.c.b16 %v1043, %v1039
    %v1136 = vpack.c.b16 %v1044, %v1040
    %v1137 = vpack.c.b16 %v1045, %v1041
    %v1138 = vpack.c.b16 %v1050, %v1046
    %v1139 = vpack.c.b16 %v1051, %v1047
    %v1140 = vpack.c.b16 %v1052, %v1048
    %v1141 = vpack.c.b16 %v1053, %v1049
    %v1142 = vpack.c.b16 %v1058, %v1054
    %v1143 = vpack.c.b16 %v1059, %v1055
    %v1144 = vpack.c.b16 %v1060, %v1056
    %v1145 = vpack.c.b16 %v1061, %v1057
    %v1146 = vpack.c.b16 %v1066, %v1062
    %v1147 = vpack.c.b16 %v1067, %v1063
    %v1148 = vpack.c.b16 %v1068, %v1064
    %v1149 = vpack.c.b16 %v1069, %v1065
    %v1150 = vpack.c.b16 %v1074, %v1070
    %v1151 = vpack.c.b16 %v1075, %v1071
    %v1152 = vpack.c.b16 %v1076, %v1072
    %v1153 = vpack.c.b16 %v1077, %v1073
    %v1154 = vpack.c.b16 %v1082, %v1078
    %v1155 = vpack.c.b16 %v1083, %v1079
    %v1156 = vpack.c.b16 %v1084, %v1080
    %v1157 = vpack.c.b16 %v1085, %v1081
    %v1158 = vpack.c.b16 %v1090, %v1086
    %v1159 = vpack.c.b16 %v1091, %v1087
    %v1160 = vpack.c.b16 %v1092, %v1088
    %v1161 = vpack.c.b16 %v1093, %v1089
    %v1162 = vpack.c.b16 %v1098, %v1094
    %v1163 = vpack.c.b16 %v1099, %v1095
    %v1164 = vpack.c.b16 %v1100, %v1096
    %v1165 = vpack.c.b16 %v1101, %v1097
    %1230 = vmatprep.subr.bf16.mxu0 %v1131
    %1231 = vmatpush1.bf16.msra.mxu0 %v1130
    %1232 = vmatprep.subr.bf16.mxu0 %v1127
    %1233 = vmatpush1.bf16.msra.mxu0 %v1126
    %1234 = vmatprep.subr.bf16.mxu0 %v1123
    %1235 = vmatpush1.bf16.msra.mxu0 %v1122
    %1236 = vmatprep.subr.bf16.mxu0 %v1119
    %1237 = vmatpush1.bf16.msra.mxu0 %v1118
    %1238 = vmatprep.subr.bf16.mxu0 %v1115
    %1239 = vmatpush1.bf16.msra.mxu0 %v1114
    %1240 = vmatprep.subr.bf16.mxu0 %v1111
    %1241 = vmatpush1.bf16.msra.mxu0 %v1110
    %1242 = vmatprep.subr.bf16.mxu0 %v1107
    %1243 = vmatpush1.bf16.msra.mxu0 %v1106
    %1244 = vmatprep.subr.bf16.mxu0 %v1103
    %1245 = vmatpush1.bf16.msra.mxu0 %v1102
    %1246 = vmatprep.subr.bf16.mxu0 %v1163
    %1247 = vmatpush2.bf16.msra.mxu0 %v1162
    %1248 = vmatprep.subr.bf16.mxu0 %v1159
    %1249 = vmatpush2.bf16.msra.mxu0 %v1158
    %1250 = vmatprep.subr.bf16.mxu0 %v1155
    %1251 = vmatpush2.bf16.msra.mxu0 %v1154
    %1252 = vmatprep.subr.bf16.mxu0 %v1151
    %1253 = vmatpush2.bf16.msra.mxu0 %v1150
    %1254 = vmatprep.subr.bf16.mxu0 %v1147
    %1255 = vmatpush2.bf16.msra.mxu0 %v1146
    %1256 = vmatprep.subr.bf16.mxu0 %v1143
    %1257 = vmatpush2.bf16.msra.mxu0 %v1142
    %1258 = vmatprep.subr.bf16.mxu0 %v1139
    %1259 = vmatpush2.bf16.msra.mxu0 %v1138
    %1260 = vmatprep.subr.bf16.mxu0 %v1135
    %1261 = vmatpush2.bf16.msra.mxu0 %v1134
    %1262 = vmatprep.mubr.bf16.mxu0 %v823
    %1263 = vmatmul.mubr.bf16.gmra.mxu0 %v822
    %v1264 = vpop.f32.mrf.mxu0
    %v1265 = vadd.f32 %v893, %v1264
    %v1266 = vpop.f32.mrf.mxu0
    %v1267 = vadd.f32 %v897, %v1266
    %v1268 = vpop.f32.mrf.mxu0
    %v1269 = vpop.f32.mrf.mxu0
    %1270 = vdwg.mxu0
    %1271 = vmatprep.subr.bf16.mxu0 %v1133
    %1272 = vmatpush1.bf16.msra.mxu0 %v1132
    %1273 = vmatprep.subr.bf16.mxu0 %v1129
    %1274 = vmatpush1.bf16.msra.mxu0 %v1128
    %1275 = vmatprep.subr.bf16.mxu0 %v1125
    %1276 = vmatpush1.bf16.msra.mxu0 %v1124
    %1277 = vmatprep.subr.bf16.mxu0 %v1121
    %1278 = vmatpush1.bf16.msra.mxu0 %v1120
    %1279 = vmatprep.subr.bf16.mxu0 %v1117
    %1280 = vmatpush1.bf16.msra.mxu0 %v1116
    %1281 = vmatprep.subr.bf16.mxu0 %v1113
    %1282 = vmatpush1.bf16.msra.mxu0 %v1112
    %1283 = vmatprep.subr.bf16.mxu0 %v1109
    %1284 = vmatpush1.bf16.msra.mxu0 %v1108
    %1285 = vmatprep.subr.bf16.mxu0 %v1105
    %1286 = vmatpush1.bf16.msra.mxu0 %v1104
    %1287 = vmatprep.subr.bf16.mxu0 %v1165
    %1288 = vmatpush2.bf16.msra.mxu0 %v1164
    %1289 = vmatprep.subr.bf16.mxu0 %v1161
    %1290 = vmatpush2.bf16.msra.mxu0 %v1160
    %1291 = vmatprep.subr.bf16.mxu0 %v1157
    %1292 = vmatpush2.bf16.msra.mxu0 %v1156
    %1293 = vmatprep.subr.bf16.mxu0 %v1153
    %1294 = vmatpush2.bf16.msra.mxu0 %v1152
    %1295 = vmatprep.subr.bf16.mxu0 %v1149
    %1296 = vmatpush2.bf16.msra.mxu0 %v1148
    %1297 = vmatprep.subr.bf16.mxu0 %v1145
    %1298 = vmatpush2.bf16.msra.mxu0 %v1144
    %1299 = vmatprep.subr.bf16.mxu0 %v1141
    %1300 = vmatpush2.bf16.msra.mxu0 %v1140
    %1301 = vmatprep.subr.bf16.mxu0 %v1137
    %1302 = vmatpush2.bf16.msra.mxu0 %v1136
    %1303 = vmatprep.mubr.bf16.mxu0 %v823
    %1304 = vmatmul.mubr.bf16.gmra.mxu0 %v822
    %v1305 = vpop.f32.mrf.mxu0
    %v1306 = vadd.f32 %v901, %v1305
    %v1307 = vpop.f32.mrf.mxu0
    %v1308 = vadd.f32 %v905, %v1307
    %v1309 = vpop.f32.mrf.mxu0
    %v1310 = vpop.f32.mrf.mxu0
    %1311 = vdwg.mxu0
    %v1312 = vmax.f32 %v1265, 0.0
    %v1313 = vmax.f32 %v1267, 0.0
    %v1314 = vmax.f32 %v1306, 0.0
    %v1315 = vmax.f32 %v1308, 0.0
    %v1316 = vpack.c.bf16 %v1312, %v1312
    %v1317 = vpack.c.bf16 %v1313, %v1313
    %v1318 = vpack.c.bf16 %v1314, %v1314
    %v1319 = vpack.c.bf16 %v1315, %v1315
    %v1320 = vld [vmem:[%s7] sm:$0xf]
    %v1321 = vld [vmem:[%s7 + $0x4] sm:$0xf]
    %v1322 = vld [vmem:[%s7 + $0x8] sm:$0xf]
    %v1323 = vld [vmem:[%s7 + $0xc] sm:$0xf]
    %v1324 = vld [vmem:[%s7 + $0x10] sm:$0xf]
    %v1325 = vld [vmem:[%s7 + $0x14] sm:$0xf]
    %v1326 = vld [vmem:[%s7 + $0x18] sm:$0xf]
    %v1327 = vld [vmem:[%s7 + $0x1c] sm:$0xf]
    %v1328 = vld [vmem:[%s7 + $0x20] sm:$0xf]
    %v1329 = vld [vmem:[%s7 + $0x24] sm:$0xf]
    %v1330 = vld [vmem:[%s7 + $0x28] sm:$0xf]
    %v1331 = vld [vmem:[%s7 + $0x2c] sm:$0xf]
    %v1332 = vld [vmem:[%s7 + $0x30] sm:$0xf]
    %v1333 = vld [vmem:[%s7 + $0x34] sm:$0xf]
    %v1334 = vld [vmem:[%s7 + $0x38] sm:$0xf]
    %v1335 = vld [vmem:[%s7 + $0x3c] sm:$0xf]
    %v1336 = vld [vmem:[%s7 + $0x40] sm:$0xf]
    %v1337 = vld [vmem:[%s7 + $0x44] sm:$0xf]
    %v1338 = vld [vmem:[%s7 + $0x48] sm:$0xf]
    %v1339 = vld [vmem:[%s7 + $0x4c] sm:$0xf]
    %v1340 = vld [vmem:[%s7 + $0x50] sm:$0xf]
    %v1341 = vld [vmem:[%s7 + $0x54] sm:$0xf]
    %v1342 = vld [vmem:[%s7 + $0x58] sm:$0xf]
    %v1343 = vld [vmem:[%s7 + $0x5c] sm:$0xf]
    %v1344 = vld [vmem:[%s7 + $0x60] sm:$0xf]
    %v1345 = vld [vmem:[%s7 + $0x64] sm:$0xf]
    %v1346 = vld [vmem:[%s7 + $0x68] sm:$0xf]
    %v1347 = vld [vmem:[%s7 + $0x6c] sm:$0xf]
    %v1348 = vld [vmem:[%s7 + $0x70] sm:$0xf]
    %v1349 = vld [vmem:[%s7 + $0x74] sm:$0xf]
    %v1350 = vld [vmem:[%s7 + $0x78] sm:$0xf]
    %v1351 = vld [vmem:[%s7 + $0x7c] sm:$0xf]
    %v1352 = vld [vmem:[%s7 + $0x80] sm:$0xf]
    %v1353 = vld [vmem:[%s7 + $0x84] sm:$0xf]
    %v1354 = vld [vmem:[%s7 + $0x88] sm:$0xf]
    %v1355 = vld [vmem:[%s7 + $0x8c] sm:$0xf]
    %v1356 = vld [vmem:[%s7 + $0x90] sm:$0xf]
    %v1357 = vld [vmem:[%s7 + $0x94] sm:$0xf]
    %v1358 = vld [vmem:[%s7 + $0x98] sm:$0xf]
    %v1359 = vld [vmem:[%s7 + $0x9c] sm:$0xf]
    %v1360 = vld [vmem:[%s7 + $0xa0] sm:$0xf]
    %v1361 = vld [vmem:[%s7 + $0xa4] sm:$0xf]
    %v1362 = vld [vmem:[%s7 + $0xa8] sm:$0xf]
    %v1363 = vld [vmem:[%s7 + $0xac] sm:$0xf]
    %v1364 = vld [vmem:[%s7 + $0xb0] sm:$0xf]
    %v1365 = vld [vmem:[%s7 + $0xb4] sm:$0xf]
    %v1366 = vld [vmem:[%s7 + $0xb8] sm:$0xf]
    %v1367 = vld [vmem:[%s7 + $0xbc] sm:$0xf]
    %v1368 = vld [vmem:[%s7 + $0xc0] sm:$0xf]
    %v1369 = vld [vmem:[%s7 + $0xc4] sm:$0xf]
    %v1370 = vld [vmem:[%s7 + $0xc8] sm:$0xf]
    %v1371 = vld [vmem:[%s7 + $0xcc] sm:$0xf]
    %v1372 = vld [vmem:[%s7 + $0xd0] sm:$0xf]
    %v1373 = vld [vmem:[%s7 + $0xd4] sm:$0xf]
    %v1374 = vld [vmem:[%s7 + $0xd8] sm:$0xf]
    %v1375 = vld [vmem:[%s7 + $0xdc] sm:$0xf]
    %v1376 = vld [vmem:[%s7 + $0xe0] sm:$0xf]
    %v1377 = vld [vmem:[%s7 + $0xe4] sm:$0xf]
    %v1378 = vld [vmem:[%s7 + $0xe8] sm:$0xf]
    %v1379 = vld [vmem:[%s7 + $0xec] sm:$0xf]
    %v1380 = vld [vmem:[%s7 + $0xf0] sm:$0xf]
    %v1381 = vld [vmem:[%s7 + $0xf4] sm:$0xf]
    %v1382 = vld [vmem:[%s7 + $0xf8] sm:$0xf]
    %v1383 = vld [vmem:[%s7 + $0xfc] sm:$0xf]
    %v1384 = vld [vmem:[%s8] sm:$0x1]
    %v1386 = vlaneseq
    %v1387 = vshrl.u32 %v1386, 7
    %v1388 = vsub.s32 0, %v1387
    %v1389 = vrot.slane %v1384, %v1388
    %v1455 = vunpack.c.l.b16 %v1320
    %v1456 = vunpack.c.l.b16 %v1321
    %v1457 = vunpack.c.l.b16 %v1322
    %v1458 = vunpack.c.l.b16 %v1323
    %v1459 = vunpack.c.l.b16 %v1324
    %v1460 = vunpack.c.l.b16 %v1325
    %v1461 = vunpack.c.l.b16 %v1326
    %v1462 = vunpack.c.l.b16 %v1327
    %v1463 = vunpack.c.l.b16 %v1328
    %v1464 = vunpack.c.l.b16 %v1329
    %v1465 = vunpack.c.l.b16 %v1330
    %v1466 = vunpack.c.l.b16 %v1331
    %v1467 = vunpack.c.l.b16 %v1332
    %v1468 = vunpack.c.l.b16 %v1333
    %v1469 = vunpack.c.l.b16 %v1334
    %v1470 = vunpack.c.l.b16 %v1335
    %v1471 = vunpack.c.l.b16 %v1336
    %v1472 = vunpack.c.l.b16 %v1337
    %v1473 = vunpack.c.l.b16 %v1338
    %v1474 = vunpack.c.l.b16 %v1339
    %v1475 = vunpack.c.l.b16 %v1340
    %v1476 = vunpack.c.l.b16 %v1341
    %v1477 = vunpack.c.l.b16 %v1342
    %v1478 = vunpack.c.l.b16 %v1343
    %v1479 = vunpack.c.l.b16 %v1344
    %v1480 = vunpack.c.l.b16 %v1345
    %v1481 = vunpack.c.l.b16 %v1346
    %v1482 = vunpack.c.l.b16 %v1347
    %v1483 = vunpack.c.l.b16 %v1348
    %v1484 = vunpack.c.l.b16 %v1349
    %v1485 = vunpack.c.l.b16 %v1350
    %v1486 = vunpack.c.l.b16 %v1351
    %v1487 = vunpack.c.l.b16 %v1352
    %v1488 = vunpack.c.l.b16 %v1353
    %v1489 = vunpack.c.l.b16 %v1354
    %v1490 = vunpack.c.l.b16 %v1355
    %v1491 = vunpack.c.l.b16 %v1356
    %v1492 = vunpack.c.l.b16 %v1357
    %v1493 = vunpack.c.l.b16 %v1358
    %v1494 = vunpack.c.l.b16 %v1359
    %v1495 = vunpack.c.l.b16 %v1360
    %v1496 = vunpack.c.l.b16 %v1361
    %v1497 = vunpack.c.l.b16 %v1362
    %v1498 = vunpack.c.l.b16 %v1363
    %v1499 = vunpack.c.l.b16 %v1364
    %v1500 = vunpack.c.l.b16 %v1365
    %v1501 = vunpack.c.l.b16 %v1366
    %v1502 = vunpack.c.l.b16 %v1367
    %v1503 = vunpack.c.l.b16 %v1368
    %v1504 = vunpack.c.l.b16 %v1369
    %v1505 = vunpack.c.l.b16 %v1370
    %v1506 = vunpack.c.l.b16 %v1371
    %v1507 = vunpack.c.l.b16 %v1372
    %v1508 = vunpack.c.l.b16 %v1373
    %v1509 = vunpack.c.l.b16 %v1374
    %v1510 = vunpack.c.l.b16 %v1375
    %v1511 = vunpack.c.l.b16 %v1376
    %v1512 = vunpack.c.l.b16 %v1377
    %v1513 = vunpack.c.l.b16 %v1378
    %v1514 = vunpack.c.l.b16 %v1379
    %v1515 = vunpack.c.l.b16 %v1380
    %v1516 = vunpack.c.l.b16 %v1381
    %v1517 = vunpack.c.l.b16 %v1382
    %v1518 = vunpack.c.l.b16 %v1383
    %v1519 = vpack.c.b16 %v1456, %v1455
    %v1520 = vpack.c.b16 %v1458, %v1457
    %v1521 = vpack.c.b16 %v1460, %v1459
    %v1522 = vpack.c.b16 %v1462, %v1461
    %v1523 = vpack.c.b16 %v1464, %v1463
    %v1524 = vpack.c.b16 %v1466, %v1465
    %v1525 = vpack.c.b16 %v1468, %v1467
    %v1526 = vpack.c.b16 %v1470, %v1469
    %v1527 = vpack.c.b16 %v1472, %v1471
    %v1528 = vpack.c.b16 %v1474, %v1473
    %v1529 = vpack.c.b16 %v1476, %v1475
    %v1530 = vpack.c.b16 %v1478, %v1477
    %v1531 = vpack.c.b16 %v1480, %v1479
    %v1532 = vpack.c.b16 %v1482, %v1481
    %v1533 = vpack.c.b16 %v1484, %v1483
    %v1534 = vpack.c.b16 %v1486, %v1485
    %v1535 = vpack.c.b16 %v1488, %v1487
    %v1536 = vpack.c.b16 %v1490, %v1489
    %v1537 = vpack.c.b16 %v1492, %v1491
    %v1538 = vpack.c.b16 %v1494, %v1493
    %v1539 = vpack.c.b16 %v1496, %v1495
    %v1540 = vpack.c.b16 %v1498, %v1497
    %v1541 = vpack.c.b16 %v1500, %v1499
    %v1542 = vpack.c.b16 %v1502, %v1501
    %v1543 = vpack.c.b16 %v1504, %v1503
    %v1544 = vpack.c.b16 %v1506, %v1505
    %v1545 = vpack.c.b16 %v1508, %v1507
    %v1546 = vpack.c.b16 %v1510, %v1509
    %v1547 = vpack.c.b16 %v1512, %v1511
    %v1548 = vpack.c.b16 %v1514, %v1513
    %v1549 = vpack.c.b16 %v1516, %v1515
    %v1550 = vpack.c.b16 %v1518, %v1517
    %1583 = vmatprep.subr.bf16.mxu0 0
    %1584 = vmatpush1.bf16.msra.mxu0 %v1526
    %1585 = vmatprep.subr.bf16.mxu0 0
    %1586 = vmatpush1.bf16.msra.mxu0 %v1525
    %1587 = vmatprep.subr.bf16.mxu0 0
    %1588 = vmatpush1.bf16.msra.mxu0 %v1524
    %1589 = vmatprep.subr.bf16.mxu0 0
    %1590 = vmatpush1.bf16.msra.mxu0 %v1523
    %1591 = vmatprep.subr.bf16.mxu0 0
    %1592 = vmatpush1.bf16.msra.mxu0 %v1522
    %1593 = vmatprep.subr.bf16.mxu0 0
    %1594 = vmatpush1.bf16.msra.mxu0 %v1521
    %1595 = vmatprep.subr.bf16.mxu0 0
    %1596 = vmatpush1.bf16.msra.mxu0 %v1520
    %1597 = vmatprep.subr.bf16.mxu0 0
    %1598 = vmatpush1.bf16.msra.mxu0 %v1519
    %1599 = vmatprep.subr.bf16.mxu0 0
    %1600 = vmatpush2.bf16.msra.mxu0 %v1534
    %1601 = vmatprep.subr.bf16.mxu0 0
    %1602 = vmatpush2.bf16.msra.mxu0 %v1533
    %1603 = vmatprep.subr.bf16.mxu0 0
    %1604 = vmatpush2.bf16.msra.mxu0 %v1532
    %1605 = vmatprep.subr.bf16.mxu0 0
    %1606 = vmatpush2.bf16.msra.mxu0 %v1531
    %1607 = vmatprep.subr.bf16.mxu0 0
    %1608 = vmatpush2.bf16.msra.mxu0 %v1530
    %1609 = vmatprep.subr.bf16.mxu0 0
    %1610 = vmatpush2.bf16.msra.mxu0 %v1529
    %1611 = vmatprep.subr.bf16.mxu0 0
    %1612 = vmatpush2.bf16.msra.mxu0 %v1528
    %1613 = vmatprep.subr.bf16.mxu0 0
    %1614 = vmatpush2.bf16.msra.mxu0 %v1527
    %1615 = vmatprep.mubr.bf16.mxu0 %v1317
    %1616 = vmatmul.mubr.bf16.gmra.mxu0 %v1316
    %v1617 = vpop.f32.mrf.mxu0
    %v1618 = vadd.f32 %v1389, %v1617
    %v1619 = vpop.f32.mrf.mxu0
    %v1620 = vpop.f32.mrf.mxu0
    %v1621 = vpop.f32.mrf.mxu0
    %1622 = vdwg.mxu0
    %1623 = vmatprep.subr.bf16.mxu0 0
    %1624 = vmatpush1.bf16.msra.mxu0 %v1542
    %1625 = vmatprep.subr.bf16.mxu0 0
    %1626 = vmatpush1.bf16.msra.mxu0 %v1541
    %1627 = vmatprep.subr.bf16.mxu0 0
    %1628 = vmatpush1.bf16.msra.mxu0 %v1540
    %1629 = vmatprep.subr.bf16.mxu0 0
    %1630 = vmatpush1.bf16.msra.mxu0 %v1539
    %1631 = vmatprep.subr.bf16.mxu0 0
    %1632 = vmatpush1.bf16.msra.mxu0 %v1538
    %1633 = vmatprep.subr.bf16.mxu0 0
    %1634 = vmatpush1.bf16.msra.mxu0 %v1537
    %1635 = vmatprep.subr.bf16.mxu0 0
    %1636 = vmatpush1.bf16.msra.mxu0 %v1536
    %1637 = vmatprep.subr.bf16.mxu0 0
    %1638 = vmatpush1.bf16.msra.mxu0 %v1535
    %1639 = vmatprep.subr.bf16.mxu0 0
    %1640 = vmatpush2.bf16.msra.mxu0 %v1550
    %1641 = vmatprep.subr.bf16.mxu0 0
    %1642 = vmatpush2.bf16.msra.mxu0 %v1549
    %1643 = vmatprep.subr.bf16.mxu0 0
    %1644 = vmatpush2.bf16.msra.mxu0 %v1548
    %1645 = vmatprep.subr.bf16.mxu0 0
    %1646 = vmatpush2.bf16.msra.mxu0 %v1547
    %1647 = vmatprep.subr.bf16.mxu0 0
    %1648 = vmatpush2.bf16.msra.mxu0 %v1546
    %1649 = vmatprep.subr.bf16.mxu0 0
    %1650 = vmatpush2.bf16.msra.mxu0 %v1545
    %1651 = vmatprep.subr.bf16.mxu0 0
    %1652 = vmatpush2.bf16.msra.mxu0 %v1544
    %1653 = vmatprep.subr.bf16.mxu0 0
    %1654 = vmatpush2.bf16.msra.mxu0 %v1543
    %1655 = vmatprep.mubr.bf16.mxu0 %v1319
    %1656 = vmatmul.mubr.bf16.gmra.mxu0 %v1318
    %v1657 = vpop.f32.mrf.mxu0
    %v1658 = vadd.f32 %v1618, %v1657
    %v1659 = vpop.f32.mrf.mxu0
    %v1660 = vpop.f32.mrf.mxu0
    %v1661 = vpop.f32.mrf.mxu0
    %1662 = vdwg.mxu0
    %1663 = vst [vmem:[%s10] sm:$0xff] %v1658
  $region45: #{_lambda_.1} parent=0 // pred_fallthru
    _
  // Predicated region
  $region46: #{_lambda_.1} parent=0 // pred_check
    _
  $region47: #{_lambda_.1} parent=0 // pred_check_branch
    %1665 = sbr.rel (0) target = $region49
  $region48: #{_lambda_.1} parent=0 // pred_region
    _
  $region49: #{_lambda_.1} parent=0 // pred_fallthru
    _
  // Predicated region
  $region50: #{_lambda_.1} parent=0 // pred_check
    _
  $region51: #{_lambda_.1} parent=0 // pred_check_branch
    %1667 = sbr.rel (0) target = $region53
  $region52: #{_lambda_.1} parent=0 // pred_region
    _
  $region53: #{_lambda_.1} parent=0 // pred_fallthru
    _
  // Predicated region
  $region54: #{_lambda_.1} parent=0 // pred_check
    _
  $region55: #{_lambda_.1} parent=0 // pred_check_branch
    %1669 = sbr.rel (0) target = $region57
  $region56: #{_lambda_.1} parent=0 // pred_region
    _
  $region57: #{_lambda_.1} parent=0 // pred_fallthru
    _
  // Predicated region
  $region58: #{_lambda_.1} parent=0 // pred_check
    _
  $region59: #{_lambda_.1} parent=0 // pred_check_branch
    %1671 = sbr.rel (0) target = $region61
  $region60: #{_lambda_.1} parent=0 // pred_region
    _
  $region61: #{_lambda_.1} parent=0 // pred_fallthru
    _

</llo_original>
